<compile_context>
chip_gen: v5e
topology: v5e:2x2
jax: 0.10.0
libtpu: 0.0.40
codegen_flags: <defaults>
</compile_context>

<pallas_src>
import functools

import jax
import jax.numpy as jnp
from jax import lax
from jax.experimental import pallas as pl
from jax.experimental.pallas import tpu as pltpu


# ----------------------------------------------------------- fused kernel --
def _attention2_kernel(x_ref, wqkv_ref, wproj_ref, bproj_ref, o_ref, *, num_heads):
    """Fused Attention2 forward for one batch element.

    x_ref:     (N, C)    input tokens
    wqkv_ref:  (C, 3C)   [scale * Wq^T | Wkv^T]   (qkv_bias=False)
    wproj_ref: (C, C)    Wproj^T
    bproj_ref: (1, C)    projection bias
    o_ref:     (N, C)    output
    """
    N, C = x_ref.shape
    D = C // num_heads

    # Fused Q + KV projection: one lane-dense MXU matmul -> (N, 3C) in vregs.
    qkv = jnp.dot(x_ref[...], wqkv_ref[...], preferred_element_type=jnp.float32)

    # Column layout of `qkv` (matches the torch reshape(B, N, H, D) exactly):
    #   [0,  C)  -> q, head-major (col = h*D + d), already scaled by qk_scale
    #   [C, 2C)  -> k, head-major
    #   [2C,3C)  -> v, head-major
    ctx_heads = []
    for h in range(num_heads):  # static unroll, 2-D ops only (robust lowering)
        qh = qkv[:, h * D:(h + 1) * D]                       # (N, D)
        kh = qkv[:, C + h * D:C + (h + 1) * D]               # (N, D)
        vh = qkv[:, 2 * C + h * D:2 * C + (h + 1) * D]       # (N, D)

        # s = q_h @ k_h^T : contract the D axis of both operands on the MXU.
        s = lax.dot_general(qh, kh, (((1,), (1,)), ((), ())),
                            preferred_element_type=jnp.float32)      # (N, N)

        # Numerically stable softmax; stats stay in f32.
        m = jnp.max(s, axis=-1, keepdims=True)
        p = jnp.exp(s - m)                                            # EUP exp
        denom = jnp.sum(p, axis=-1, keepdims=True)
        p = p * pl.reciprocal(denom, approx=True)                     # EUP recip

        ctx_heads.append(
            jnp.dot(p.astype(vh.dtype), vh,
                    preferred_element_type=jnp.float32))              # (N, D)

    # Merge heads back into the lane-dense (N, C) layout -> output projection.
    ctx = jnp.concatenate(ctx_heads, axis=1)                          # (N, C)
    out = jnp.dot(ctx.astype(wproj_ref.dtype), wproj_ref[...],
                  preferred_element_type=jnp.float32) + bproj_ref[...]
    o_ref[...] = out.astype(o_ref.dtype)


# ------------------------------------------------------- weight preparation -
def prepare_attention2_params(wq, wkv, wproj, bproj, *, num_heads, qk_scale=None):
    """One-time weight folding (do OUTSIDE the hot forward / jit loop).

    Torch Linear layout in: wq (C, C), wkv (2C, C), wproj (C, C), bproj (C,).
    Returns (w_qkv (C, 3C) with the qk scale folded into the q columns,
             w_proj (C, C) = Wproj^T, b_proj (1, C)).
    """
    C = wq.shape[0]
    D = C // num_heads
    scale = qk_scale if qk_scale is not None else D ** (-0.5)
    w_qkv = jnp.concatenate([wq.T * jnp.asarray(scale, wq.dtype), wkv.T], axis=1)
    return w_qkv, wproj.T, bproj.reshape(1, C)


# ----------------------------------------------------------------- forward --
def attention2_forward(x, w_qkv, w_proj, b_proj, *, num_heads):
    """Attention2 forward (sr_ratio=1, linear=False, qkv_bias=False).

    x: (B, N, C); weights produced by prepare_attention2_params.
    """
    B, N, C = x.shape
    assert C % num_heads == 0
    H, D = num_heads, C // num_heads

    kernel = functools.partial(_attention2_kernel, num_heads=num_heads)
    cost = pl.CostEstimate(
        flops=(2 * B * N * C * (3 * C)        # fused qkv projection
               + 4 * B * H * N * N * D        # q k^T and p v
               + 2 * B * N * C * C),          # output projection
        transcendentals=B * H * N * N,        # softmax exp
        bytes_accessed=4 * (2 * B * N * C + 3 * C * C + C * C + C),
    )
    return pl.pallas_call(
        kernel,
        out_shape=jax.ShapeDtypeStruct((B, N, C), x.dtype),
        grid=(B,),
        in_specs=[
            pl.BlockSpec((None, N, C), lambda b: (b, 0, 0)),   # x[b]
            pl.BlockSpec((C, 3 * C), lambda b: (0, 0)),        # qkv weight (resident)
            pl.BlockSpec((C, C), lambda b: (0, 0)),            # proj weight (resident)
            pl.BlockSpec((1, C), lambda b: (0, 0)),            # proj bias
        ],
        out_specs=pl.BlockSpec((None, N, C), lambda b: (b, 0, 0)),
        compiler_params=pltpu.CompilerParams(
            dimension_semantics=("parallel",)),
        cost_estimate=cost,
    )(x, w_qkv, w_proj, b_proj)


# ------------------------------------------------------------- reference ----
def attention2_reference(x, wq, wkv, wproj, bproj, *, num_heads, qk_scale=None):
    B, N, C = x.shape
    hd = C // num_heads
    scale = qk_scale if qk_scale is not None else hd ** (-0.5)
    q = (x @ wq.T).reshape(B, N, num_heads, hd).transpose(0, 2, 1, 3)
    kv = (x @ wkv.T).reshape(B, N, 2, num_heads, hd).transpose(2, 0, 3, 1, 4)
    k, v = kv[0], kv[1]
    attn = (q @ jnp.swapaxes(k, -2, -1)) * scale
    attn = jax.nn.softmax(attn, axis=-1)
    out = (attn @ v).transpose(0, 2, 1, 3).reshape(B, N, C)
    return out @ wproj.T + bproj


if __name__ == "__main__":
    # Small shapes consistent with the module: B=2, H=W=8 -> N=64, dim=64, heads=8.
    B, Himg, Wimg, C, num_heads = 2, 8, 8, 64, 8
    N = Himg * Wimg

    key = jax.random.PRNGKey(0)
    kx, kq, kkv, kp, kb = jax.random.split(key, 5)
    x = jax.random.normal(kx, (B, N, C), dtype=jnp.float32)
    wq = 0.05 * jax.random.normal(kq, (C, C), dtype=jnp.float32)
    wkv = 0.05 * jax.random.normal(kkv, (2 * C, C), dtype=jnp.float32)
    wproj = 0.05 * jax.random.normal(kp, (C, C), dtype=jnp.float32)
    bproj = 0.05 * jax.random.normal(kb, (C,), dtype=jnp.float32)

    # Weight folding happens once, outside the forward (perf-review item).
    w_qkv, w_proj, b_proj = prepare_attention2_params(
        wq, wkv, wproj, bproj, num_heads=num_heads)

    fwd = jax.jit(functools.partial(attention2_forward, num_heads=num_heads))
    out = jax.block_until_ready(fwd(x, w_qkv, w_proj, b_proj))

    ref = attention2_reference(x, wq, wkv, wproj, bproj, num_heads=num_heads)
    assert out.shape == (B, N, C) and out.dtype == x.dtype
    max_err = float(jnp.max(jnp.abs(out - ref)))
    # Tolerance accounts for the approximate (EUP) reciprocal in the softmax
    # denominator; with these magnitudes the induced error is << 1e-3.
    assert jnp.allclose(out, ref, atol=2e-3, rtol=2e-3), max_err

    print("KERNEL_OK")
</pallas_src>

<mosaic_0001>
module attributes {stable_mosaic.version = 11 : i64} {
  func.func @_attention2_kernel(%arg0: i32, %arg1: memref<1x64x64xf32, #tpu.memory_space<vmem>>, %arg2: memref<64x192xf32, #tpu.memory_space<vmem>>, %arg3: memref<64x64xf32, #tpu.memory_space<vmem>>, %arg4: memref<1x64xf32, #tpu.memory_space<vmem>>, %arg5: memref<1x64x64xf32, #tpu.memory_space<vmem>>) attributes {dimension_semantics = [#tpu.dimension_semantics<parallel>], iteration_bounds = array<i64: 2>, scalar_prefetch = 0 : i64, scratch_operands = 0 : i64, tpu.core_type = #tpu.core_type<tc>, window_params = [{transform_indices = @transform_0, window_bounds = array<i64: 1, 64, 64>}, {pipeline_mode = #tpu.pipeline_mode<synchronous>, transform_indices = @transform_1, window_bounds = array<i64: 64, 192>}, {pipeline_mode = #tpu.pipeline_mode<synchronous>, transform_indices = @transform_2, window_bounds = array<i64: 64, 64>}, {pipeline_mode = #tpu.pipeline_mode<synchronous>, transform_indices = @transform_3, window_bounds = array<i64: 1, 64>}, {transform_indices = @transform_4, window_bounds = array<i64: 1, 64, 64>}]} {
    %c0 = arith.constant 0 : index
    %c0_0 = arith.constant 0 : index
    %c0_1 = arith.constant 0 : index
    %0 = vector.load %arg1[%c0, %c0_0, %c0_1] : memref<1x64x64xf32, #tpu.memory_space<vmem>>, vector<1x64x64xf32>
    %1 = vector.shape_cast %0 : vector<1x64x64xf32> to vector<64x64xf32>
    %c0_2 = arith.constant 0 : index
    %c0_3 = arith.constant 0 : index
    %2 = vector.load %arg2[%c0_2, %c0_3] : memref<64x192xf32, #tpu.memory_space<vmem>>, vector<64x192xf32>
    %cst = arith.constant dense<0.000000e+00> : vector<64x192xf32>
    %3 = tpu.matmul %1, %2, %cst {dimension_numbers = #tpu.dot_dimension_numbers<[1], [0], [0], [1], [0, 0, 1, 1], [], []>} : vector<64x64xf32>, vector<64x192xf32>, vector<64x192xf32> -> vector<64x192xf32>
    %4 = vector.extract_strided_slice %3 {offsets = [0, 0], sizes = [64, 8], strides = [1, 1]} : vector<64x192xf32> to vector<64x8xf32>
    %5 = vector.extract_strided_slice %3 {offsets = [0, 64], sizes = [64, 8], strides = [1, 1]} : vector<64x192xf32> to vector<64x8xf32>
    %6 = vector.extract_strided_slice %3 {offsets = [0, 128], sizes = [64, 8], strides = [1, 1]} : vector<64x192xf32> to vector<64x8xf32>
    %cst_4 = arith.constant dense<0.000000e+00> : vector<64x64xf32>
    %7 = tpu.matmul %4, %5, %cst_4 {dimension_numbers = #tpu.dot_dimension_numbers<[1], [1], [0], [0], [0, 0, 1, 0], [], []>} : vector<64x8xf32>, vector<64x8xf32>, vector<64x64xf32> -> vector<64x64xf32>
    %cst_5 = arith.constant dense<0xFF800000> : vector<64xf32>
    %8 = vector.multi_reduction <maximumf>, %7, %cst_5 [1] : vector<64x64xf32> to vector<64xf32>
    %9 = vector.shape_cast %8 : vector<64xf32> to vector<64x1xf32>
    %10 = vector.broadcast %9 : vector<64x1xf32> to vector<64x64xf32>
    %11 = arith.subf %7, %10 : vector<64x64xf32>
    %12 = math.exp %11 : vector<64x64xf32>
    %cst_6 = arith.constant dense<0.000000e+00> : vector<64xf32>
    %13 = vector.multi_reduction <add>, %12, %cst_6 [1] : vector<64x64xf32> to vector<64xf32>
    %14 = vector.shape_cast %13 : vector<64xf32> to vector<64x1xf32>
    %15 = tpu.reciprocal %14 {approx = true} : vector<64x1xf32> -> vector<64x1xf32>
    %16 = vector.broadcast %15 : vector<64x1xf32> to vector<64x64xf32>
    %17 = arith.mulf %12, %16 : vector<64x64xf32>
    %cst_7 = arith.constant dense<0.000000e+00> : vector<64x8xf32>
    %18 = tpu.matmul %17, %6, %cst_7 {dimension_numbers = #tpu.dot_dimension_numbers<[1], [0], [0], [1], [0, 0, 1, 1], [], []>} : vector<64x64xf32>, vector<64x8xf32>, vector<64x8xf32> -> vector<64x8xf32>
    %19 = vector.extract_strided_slice %3 {offsets = [0, 8], sizes = [64, 8], strides = [1, 1]} : vector<64x192xf32> to vector<64x8xf32>
    %20 = vector.extract_strided_slice %3 {offsets = [0, 72], sizes = [64, 8], strides = [1, 1]} : vector<64x192xf32> to vector<64x8xf32>
    %21 = vector.extract_strided_slice %3 {offsets = [0, 136], sizes = [64, 8], strides = [1, 1]} : vector<64x192xf32> to vector<64x8xf32>
    %cst_8 = arith.constant dense<0.000000e+00> : vector<64x64xf32>
    %22 = tpu.matmul %19, %20, %cst_8 {dimension_numbers = #tpu.dot_dimension_numbers<[1], [1], [0], [0], [0, 0, 1, 0], [], []>} : vector<64x8xf32>, vector<64x8xf32>, vector<64x64xf32> -> vector<64x64xf32>
    %cst_9 = arith.constant dense<0xFF800000> : vector<64xf32>
    %23 = vector.multi_reduction <maximumf>, %22, %cst_9 [1] : vector<64x64xf32> to vector<64xf32>
    %24 = vector.shape_cast %23 : vector<64xf32> to vector<64x1xf32>
    %25 = vector.broadcast %24 : vector<64x1xf32> to vector<64x64xf32>
    %26 = arith.subf %22, %25 : vector<64x64xf32>
    %27 = math.exp %26 : vector<64x64xf32>
    %cst_10 = arith.constant dense<0.000000e+00> : vector<64xf32>
    %28 = vector.multi_reduction <add>, %27, %cst_10 [1] : vector<64x64xf32> to vector<64xf32>
    %29 = vector.shape_cast %28 : vector<64xf32> to vector<64x1xf32>
    %30 = tpu.reciprocal %29 {approx = true} : vector<64x1xf32> -> vector<64x1xf32>
    %31 = vector.broadcast %30 : vector<64x1xf32> to vector<64x64xf32>
    %32 = arith.mulf %27, %31 : vector<64x64xf32>
    %cst_11 = arith.constant dense<0.000000e+00> : vector<64x8xf32>
    %33 = tpu.matmul %32, %21, %cst_11 {dimension_numbers = #tpu.dot_dimension_numbers<[1], [0], [0], [1], [0, 0, 1, 1], [], []>} : vector<64x64xf32>, vector<64x8xf32>, vector<64x8xf32> -> vector<64x8xf32>
    %34 = vector.extract_strided_slice %3 {offsets = [0, 16], sizes = [64, 8], strides = [1, 1]} : vector<64x192xf32> to vector<64x8xf32>
    %35 = vector.extract_strided_slice %3 {offsets = [0, 80], sizes = [64, 8], strides = [1, 1]} : vector<64x192xf32> to vector<64x8xf32>
    %36 = vector.extract_strided_slice %3 {offsets = [0, 144], sizes = [64, 8], strides = [1, 1]} : vector<64x192xf32> to vector<64x8xf32>
    %cst_12 = arith.constant dense<0.000000e+00> : vector<64x64xf32>
    %37 = tpu.matmul %34, %35, %cst_12 {dimension_numbers = #tpu.dot_dimension_numbers<[1], [1], [0], [0], [0, 0, 1, 0], [], []>} : vector<64x8xf32>, vector<64x8xf32>, vector<64x64xf32> -> vector<64x64xf32>
    %cst_13 = arith.constant dense<0xFF800000> : vector<64xf32>
    %38 = vector.multi_reduction <maximumf>, %37, %cst_13 [1] : vector<64x64xf32> to vector<64xf32>
    %39 = vector.shape_cast %38 : vector<64xf32> to vector<64x1xf32>
    %40 = vector.broadcast %39 : vector<64x1xf32> to vector<64x64xf32>
    %41 = arith.subf %37, %40 : vector<64x64xf32>
    %42 = math.exp %41 : vector<64x64xf32>
    %cst_14 = arith.constant dense<0.000000e+00> : vector<64xf32>
    %43 = vector.multi_reduction <add>, %42, %cst_14 [1] : vector<64x64xf32> to vector<64xf32>
    %44 = vector.shape_cast %43 : vector<64xf32> to vector<64x1xf32>
    %45 = tpu.reciprocal %44 {approx = true} : vector<64x1xf32> -> vector<64x1xf32>
    %46 = vector.broadcast %45 : vector<64x1xf32> to vector<64x64xf32>
    %47 = arith.mulf %42, %46 : vector<64x64xf32>
    %cst_15 = arith.constant dense<0.000000e+00> : vector<64x8xf32>
    %48 = tpu.matmul %47, %36, %cst_15 {dimension_numbers = #tpu.dot_dimension_numbers<[1], [0], [0], [1], [0, 0, 1, 1], [], []>} : vector<64x64xf32>, vector<64x8xf32>, vector<64x8xf32> -> vector<64x8xf32>
    %49 = vector.extract_strided_slice %3 {offsets = [0, 24], sizes = [64, 8], strides = [1, 1]} : vector<64x192xf32> to vector<64x8xf32>
    %50 = vector.extract_strided_slice %3 {offsets = [0, 88], sizes = [64, 8], strides = [1, 1]} : vector<64x192xf32> to vector<64x8xf32>
    %51 = vector.extract_strided_slice %3 {offsets = [0, 152], sizes = [64, 8], strides = [1, 1]} : vector<64x192xf32> to vector<64x8xf32>
    %cst_16 = arith.constant dense<0.000000e+00> : vector<64x64xf32>
    %52 = tpu.matmul %49, %50, %cst_16 {dimension_numbers = #tpu.dot_dimension_numbers<[1], [1], [0], [0], [0, 0, 1, 0], [], []>} : vector<64x8xf32>, vector<64x8xf32>, vector<64x64xf32> -> vector<64x64xf32>
    %cst_17 = arith.constant dense<0xFF800000> : vector<64xf32>
    %53 = vector.multi_reduction <maximumf>, %52, %cst_17 [1] : vector<64x64xf32> to vector<64xf32>
    %54 = vector.shape_cast %53 : vector<64xf32> to vector<64x1xf32>
    %55 = vector.broadcast %54 : vector<64x1xf32> to vector<64x64xf32>
    %56 = arith.subf %52, %55 : vector<64x64xf32>
    %57 = math.exp %56 : vector<64x64xf32>
    %cst_18 = arith.constant dense<0.000000e+00> : vector<64xf32>
    %58 = vector.multi_reduction <add>, %57, %cst_18 [1] : vector<64x64xf32> to vector<64xf32>
    %59 = vector.shape_cast %58 : vector<64xf32> to vector<64x1xf32>
    %60 = tpu.reciprocal %59 {approx = true} : vector<64x1xf32> -> vector<64x1xf32>
    %61 = vector.broadcast %60 : vector<64x1xf32> to vector<64x64xf32>
    %62 = arith.mulf %57, %61 : vector<64x64xf32>
    %cst_19 = arith.constant dense<0.000000e+00> : vector<64x8xf32>
    %63 = tpu.matmul %62, %51, %cst_19 {dimension_numbers = #tpu.dot_dimension_numbers<[1], [0], [0], [1], [0, 0, 1, 1], [], []>} : vector<64x64xf32>, vector<64x8xf32>, vector<64x8xf32> -> vector<64x8xf32>
    %64 = vector.extract_strided_slice %3 {offsets = [0, 32], sizes = [64, 8], strides = [1, 1]} : vector<64x192xf32> to vector<64x8xf32>
    %65 = vector.extract_strided_slice %3 {offsets = [0, 96], sizes = [64, 8], strides = [1, 1]} : vector<64x192xf32> to vector<64x8xf32>
    %66 = vector.extract_strided_slice %3 {offsets = [0, 160], sizes = [64, 8], strides = [1, 1]} : vector<64x192xf32> to vector<64x8xf32>
    %cst_20 = arith.constant dense<0.000000e+00> : vector<64x64xf32>
    %67 = tpu.matmul %64, %65, %cst_20 {dimension_numbers = #tpu.dot_dimension_numbers<[1], [1], [0], [0], [0, 0, 1, 0], [], []>} : vector<64x8xf32>, vector<64x8xf32>, vector<64x64xf32> -> vector<64x64xf32>
    %cst_21 = arith.constant dense<0xFF800000> : vector<64xf32>
    %68 = vector.multi_reduction <maximumf>, %67, %cst_21 [1] : vector<64x64xf32> to vector<64xf32>
    %69 = vector.shape_cast %68 : vector<64xf32> to vector<64x1xf32>
    %70 = vector.broadcast %69 : vector<64x1xf32> to vector<64x64xf32>
    %71 = arith.subf %67, %70 : vector<64x64xf32>
    %72 = math.exp %71 : vector<64x64xf32>
    %cst_22 = arith.constant dense<0.000000e+00> : vector<64xf32>
    %73 = vector.multi_reduction <add>, %72, %cst_22 [1] : vector<64x64xf32> to vector<64xf32>
    %74 = vector.shape_cast %73 : vector<64xf32> to vector<64x1xf32>
    %75 = tpu.reciprocal %74 {approx = true} : vector<64x1xf32> -> vector<64x1xf32>
    %76 = vector.broadcast %75 : vector<64x1xf32> to vector<64x64xf32>
    %77 = arith.mulf %72, %76 : vector<64x64xf32>
    %cst_23 = arith.constant dense<0.000000e+00> : vector<64x8xf32>
    %78 = tpu.matmul %77, %66, %cst_23 {dimension_numbers = #tpu.dot_dimension_numbers<[1], [0], [0], [1], [0, 0, 1, 1], [], []>} : vector<64x64xf32>, vector<64x8xf32>, vector<64x8xf32> -> vector<64x8xf32>
    %79 = vector.extract_strided_slice %3 {offsets = [0, 40], sizes = [64, 8], strides = [1, 1]} : vector<64x192xf32> to vector<64x8xf32>
    %80 = vector.extract_strided_slice %3 {offsets = [0, 104], sizes = [64, 8], strides = [1, 1]} : vector<64x192xf32> to vector<64x8xf32>
    %81 = vector.extract_strided_slice %3 {offsets = [0, 168], sizes = [64, 8], strides = [1, 1]} : vector<64x192xf32> to vector<64x8xf32>
    %cst_24 = arith.constant dense<0.000000e+00> : vector<64x64xf32>
    %82 = tpu.matmul %79, %80, %cst_24 {dimension_numbers = #tpu.dot_dimension_numbers<[1], [1], [0], [0], [0, 0, 1, 0], [], []>} : vector<64x8xf32>, vector<64x8xf32>, vector<64x64xf32> -> vector<64x64xf32>
    %cst_25 = arith.constant dense<0xFF800000> : vector<64xf32>
    %83 = vector.multi_reduction <maximumf>, %82, %cst_25 [1] : vector<64x64xf32> to vector<64xf32>
    %84 = vector.shape_cast %83 : vector<64xf32> to vector<64x1xf32>
    %85 = vector.broadcast %84 : vector<64x1xf32> to vector<64x64xf32>
    %86 = arith.subf %82, %85 : vector<64x64xf32>
    %87 = math.exp %86 : vector<64x64xf32>
    %cst_26 = arith.constant dense<0.000000e+00> : vector<64xf32>
    %88 = vector.multi_reduction <add>, %87, %cst_26 [1] : vector<64x64xf32> to vector<64xf32>
    %89 = vector.shape_cast %88 : vector<64xf32> to vector<64x1xf32>
    %90 = tpu.reciprocal %89 {approx = true} : vector<64x1xf32> -> vector<64x1xf32>
    %91 = vector.broadcast %90 : vector<64x1xf32> to vector<64x64xf32>
    %92 = arith.mulf %87, %91 : vector<64x64xf32>
    %cst_27 = arith.constant dense<0.000000e+00> : vector<64x8xf32>
    %93 = tpu.matmul %92, %81, %cst_27 {dimension_numbers = #tpu.dot_dimension_numbers<[1], [0], [0], [1], [0, 0, 1, 1], [], []>} : vector<64x64xf32>, vector<64x8xf32>, vector<64x8xf32> -> vector<64x8xf32>
    %94 = vector.extract_strided_slice %3 {offsets = [0, 48], sizes = [64, 8], strides = [1, 1]} : vector<64x192xf32> to vector<64x8xf32>
    %95 = vector.extract_strided_slice %3 {offsets = [0, 112], sizes = [64, 8], strides = [1, 1]} : vector<64x192xf32> to vector<64x8xf32>
    %96 = vector.extract_strided_slice %3 {offsets = [0, 176], sizes = [64, 8], strides = [1, 1]} : vector<64x192xf32> to vector<64x8xf32>
    %cst_28 = arith.constant dense<0.000000e+00> : vector<64x64xf32>
    %97 = tpu.matmul %94, %95, %cst_28 {dimension_numbers = #tpu.dot_dimension_numbers<[1], [1], [0], [0], [0, 0, 1, 0], [], []>} : vector<64x8xf32>, vector<64x8xf32>, vector<64x64xf32> -> vector<64x64xf32>
    %cst_29 = arith.constant dense<0xFF800000> : vector<64xf32>
    %98 = vector.multi_reduction <maximumf>, %97, %cst_29 [1] : vector<64x64xf32> to vector<64xf32>
    %99 = vector.shape_cast %98 : vector<64xf32> to vector<64x1xf32>
    %100 = vector.broadcast %99 : vector<64x1xf32> to vector<64x64xf32>
    %101 = arith.subf %97, %100 : vector<64x64xf32>
    %102 = math.exp %101 : vector<64x64xf32>
    %cst_30 = arith.constant dense<0.000000e+00> : vector<64xf32>
    %103 = vector.multi_reduction <add>, %102, %cst_30 [1] : vector<64x64xf32> to vector<64xf32>
    %104 = vector.shape_cast %103 : vector<64xf32> to vector<64x1xf32>
    %105 = tpu.reciprocal %104 {approx = true} : vector<64x1xf32> -> vector<64x1xf32>
    %106 = vector.broadcast %105 : vector<64x1xf32> to vector<64x64xf32>
    %107 = arith.mulf %102, %106 : vector<64x64xf32>
    %cst_31 = arith.constant dense<0.000000e+00> : vector<64x8xf32>
    %108 = tpu.matmul %107, %96, %cst_31 {dimension_numbers = #tpu.dot_dimension_numbers<[1], [0], [0], [1], [0, 0, 1, 1], [], []>} : vector<64x64xf32>, vector<64x8xf32>, vector<64x8xf32> -> vector<64x8xf32>
    %109 = vector.extract_strided_slice %3 {offsets = [0, 56], sizes = [64, 8], strides = [1, 1]} : vector<64x192xf32> to vector<64x8xf32>
    %110 = vector.extract_strided_slice %3 {offsets = [0, 120], sizes = [64, 8], strides = [1, 1]} : vector<64x192xf32> to vector<64x8xf32>
    %111 = vector.extract_strided_slice %3 {offsets = [0, 184], sizes = [64, 8], strides = [1, 1]} : vector<64x192xf32> to vector<64x8xf32>
    %cst_32 = arith.constant dense<0.000000e+00> : vector<64x64xf32>
    %112 = tpu.matmul %109, %110, %cst_32 {dimension_numbers = #tpu.dot_dimension_numbers<[1], [1], [0], [0], [0, 0, 1, 0], [], []>} : vector<64x8xf32>, vector<64x8xf32>, vector<64x64xf32> -> vector<64x64xf32>
    %cst_33 = arith.constant dense<0xFF800000> : vector<64xf32>
    %113 = vector.multi_reduction <maximumf>, %112, %cst_33 [1] : vector<64x64xf32> to vector<64xf32>
    %114 = vector.shape_cast %113 : vector<64xf32> to vector<64x1xf32>
    %115 = vector.broadcast %114 : vector<64x1xf32> to vector<64x64xf32>
    %116 = arith.subf %112, %115 : vector<64x64xf32>
    %117 = math.exp %116 : vector<64x64xf32>
    %cst_34 = arith.constant dense<0.000000e+00> : vector<64xf32>
    %118 = vector.multi_reduction <add>, %117, %cst_34 [1] : vector<64x64xf32> to vector<64xf32>
    %119 = vector.shape_cast %118 : vector<64xf32> to vector<64x1xf32>
    %120 = tpu.reciprocal %119 {approx = true} : vector<64x1xf32> -> vector<64x1xf32>
    %121 = vector.broadcast %120 : vector<64x1xf32> to vector<64x64xf32>
    %122 = arith.mulf %117, %121 : vector<64x64xf32>
    %cst_35 = arith.constant dense<0.000000e+00> : vector<64x8xf32>
    %123 = tpu.matmul %122, %111, %cst_35 {dimension_numbers = #tpu.dot_dimension_numbers<[1], [0], [0], [1], [0, 0, 1, 1], [], []>} : vector<64x64xf32>, vector<64x8xf32>, vector<64x8xf32> -> vector<64x8xf32>
    %124 = tpu.concatenate %18, %33, %48, %63, %78, %93, %108, %123 in 1 : vector<64x8xf32>, vector<64x8xf32>, vector<64x8xf32>, vector<64x8xf32>, vector<64x8xf32>, vector<64x8xf32>, vector<64x8xf32>, vector<64x8xf32> -> vector<64x64xf32>
    %c0_36 = arith.constant 0 : index
    %c0_37 = arith.constant 0 : index
    %125 = vector.load %arg3[%c0_36, %c0_37] : memref<64x64xf32, #tpu.memory_space<vmem>>, vector<64x64xf32>
    %cst_38 = arith.constant dense<0.000000e+00> : vector<64x64xf32>
    %126 = tpu.matmul %124, %125, %cst_38 {dimension_numbers = #tpu.dot_dimension_numbers<[1], [0], [0], [1], [0, 0, 1, 1], [], []>} : vector<64x64xf32>, vector<64x64xf32>, vector<64x64xf32> -> vector<64x64xf32>
    %c0_39 = arith.constant 0 : index
    %c0_40 = arith.constant 0 : index
    %127 = vector.load %arg4[%c0_39, %c0_40] : memref<1x64xf32, #tpu.memory_space<vmem>>, vector<1x64xf32>
    %128 = vector.broadcast %127 : vector<1x64xf32> to vector<64x64xf32>
    %129 = arith.addf %126, %128 : vector<64x64xf32>
    %c0_41 = arith.constant 0 : index
    %c0_42 = arith.constant 0 : index
    %c0_43 = arith.constant 0 : index
    %130 = vector.load %arg5[%c0_41, %c0_42, %c0_43] : memref<1x64x64xf32, #tpu.memory_space<vmem>>, vector<1x64x64xf32>
    %131 = vector.shape_cast %130 : vector<1x64x64xf32> to vector<64x64xf32>
    %132 = vector.shape_cast %129 : vector<64x64xf32> to vector<1x64x64xf32>
    tpu.vector_store %arg5[%c0_41, %c0_42, %c0_43], %132 {strides = array<i32>} : memref<1x64x64xf32, #tpu.memory_space<vmem>>, vector<1x64x64xf32>,
    return
  }
  func.func @transform_0(%arg0: i32) -> (i32, i32, i32) {
    %c0_i32 = arith.constant 0 : i32
    %c0_i32_0 = arith.constant 0 : i32
    %c0_i32_1 = arith.constant 0 : i32
    return %arg0, %c0_i32, %c0_i32_0 : i32, i32, i32
  }
  func.func @transform_1(%arg0: i32) -> (i32, i32) {
    %c0_i32 = arith.constant 0 : i32
    %c0_i32_0 = arith.constant 0 : i32
    %c0_i32_1 = arith.constant 0 : i32
    return %c0_i32, %c0_i32_0 : i32, i32
  }
  func.func @transform_2(%arg0: i32) -> (i32, i32) {
    %c0_i32 = arith.constant 0 : i32
    %c0_i32_0 = arith.constant 0 : i32
    %c0_i32_1 = arith.constant 0 : i32
    return %c0_i32, %c0_i32_0 : i32, i32
  }
  func.func @transform_3(%arg0: i32) -> (i32, i32) {
    %c0_i32 = arith.constant 0 : i32
    %c0_i32_0 = arith.constant 0 : i32
    %c0_i32_1 = arith.constant 0 : i32
    return %c0_i32, %c0_i32_0 : i32, i32
  }
  func.func @transform_4(%arg0: i32) -> (i32, i32, i32) {
    %c0_i32 = arith.constant 0 : i32
    %c0_i32_0 = arith.constant 0 : i32
    %c0_i32_1 = arith.constant 0 : i32
    return %arg0, %c0_i32, %c0_i32_0 : i32, i32, i32
  }
}

</mosaic_0001>

<llo_original>
// kernel: attention2_forward.1
$region0: #{attention2_forward.1}
  #allocation0 [shape = 'u32[]', space=smem, size = 0x4, offset = 0x4, fixed_abs, tag = 'smem constant byte address 0x4 - core index']
  #allocation1 [shape = 'u32[72,128]{1,0:T(1,128)}', space=vmem, size = 0x9000, scoped, tag = 'internal scratch']
  %s0 = inlined_call_operand.hbm [shape: f32[2,64,64], index: 0, kind: input, shape index: {}]
  %s1 = inlined_call_operand.hbm [shape: f32[64,192], index: 1, kind: input, shape index: {}]
  %s2 = inlined_call_operand.hbm [shape: f32[64,64], index: 2, kind: input, shape index: {}]
  %s3 = inlined_call_operand.vmem [shape: f32[1,64], index: 3, kind: input, shape index: {}]
  %s4 = inlined_call_operand.hbm [shape: f32[2,64,64], index: 4, kind: output, shape index: {}]
  %s5 = sld [smem:[#allocation0]]
  $region61: #{attention2_forward.1} parent=0
    _
  %s7 = ssub.s32 1, %s5
  %s8 = scalar_select 0, %s7, %s5
  $region1: #{attention2_forward.1} parent=0
    #allocation2 [shape = 'u8[65536]{0}', space=vmem, size = 0x10000, scoped, tag = 'input window, operand 0']
    #allocation3 [shape = 's32[2]{0}', space=sflag, size = 0x8, scoped, tag = 'scoped memory for attention2_forward.1']
    #allocation4 [shape = 's32[2]{0}', space=sflag, size = 0x8, scoped, tag = 'scoped memory for attention2_forward.1']
    #allocation5 [shape = 'u8[65536]{0}', space=vmem, size = 0x10000, scoped, tag = 'input window, operand 1, single buffered']
    #allocation6 [shape = 's32[1]{0}', space=sflag, size = 0x4, scoped, tag = 'scoped memory for attention2_forward.1']
    #allocation7 [shape = 'u8[32768]{0}', space=vmem, size = 0x8000, scoped, tag = 'input window, operand 2, single buffered']
    #allocation8 [shape = 'u8[65536]{0}', space=vmem, size = 0x10000, scoped, tag = 'output window, operand 0']
    %9 = vsyncpa [#allocation3], 0
    %s10 = scalar_lea.sflag [#allocation3], 1
    %11 = vsyncpa %s10, 0
    %12 = vsyncpa [#allocation6], 0
    %13 = vsyncpa [#allocation4], 0
    %s14 = scalar_lea.sflag [#allocation4], 1
    %15 = vsyncpa %s14, 0
    loop: start=0, step=1, limit=4
    $region2: #{attention2_forward.1} parent=1 // loop_pre_header
      _
    $region3: #{attention2_forward.1} parent=1 // loop_header
      %s17 = sphi 0, %s21
      %p18 = scmp.ge.s32.totalorder %s17, 4
      %s27 = sphi 0, %s29
      %s30 = sphi 0, %s27
      %s31 = sphi 0, %s30
      %s47 = sphi 0, %s31
      %s51 = sphi 0, %s51
      %s53 = sphi 0, %s51
      %s54 = sphi 0, %s53
      %s68 = sphi 0, %s54
      %s72 = sphi 0, %s72
      %s74 = sphi 0, %s72
      %s75 = sphi 0, %s74
      %s89 = sphi 0, %s75
      %s93 = sphi 0, %s93
      %s95 = sphi 0, %s93
      %s96 = sphi 0, %s95
      %s110 = sphi 0, %s96
      %s116 = sphi 0, %s118
      %s119 = sphi 0, %s116
      %s120 = sphi 0, %s119
      %s136 = sphi 0, %s120
    $region4: #{attention2_forward.1} parent=1 // loop_header_branch
      %20 = sbr.rel (%p18) target = $region8
    $region5: #{attention2_forward.1} parent=1 // loop_body
      %s22 = ssub.s32 %s17, 1
      %s23 = ssub.s32 %s17, 2
      %s24 = sadd.s32 %s17, 1
      %s25 = ssub.s32 %s17, %s24
      %p26 = scmp.eq.s32.totalorder %s25, 0
      %s28 = sadd.s32 %s27, 1
      %s29 = scalar_select %p26, %s27, %s28
      %p32 = pneg %p26
      %p33 = scmp.eq.s32.totalorder %s17, 1
      %p34 = por %p32, %p33
      %p35 = scmp.ne.s32.totalorder %s27, %s30
      %p36 = scmp.eq.s32.totalorder %s17, 0
      %p37 = por %p35, %p36
      %p38 = scmp.ne.s32.totalorder %s27, %s30
      %p39 = scmp.eq.s32.totalorder %s22, 1
      %p40 = por %p38, %p39
      %p41 = scmp.ne.s32.totalorder %s30, %s31
      %p42 = scmp.eq.s32.totalorder %s22, 0
      %p43 = por %p41, %p42
      %p44 = scmp.ne.s32.totalorder %s30, %s31
      %p45 = scmp.eq.s32.totalorder %s23, 1
      %p46 = por %p44, %p45
      %p48 = scmp.ne.s32.totalorder %s31, %s47
      %p49 = scmp.eq.s32.totalorder %s23, 0
      %p50 = por %p48, %p49
      %s52 = sadd.s32 %s51, 1
      %p55 = scmp.eq.s32.totalorder %s17, 1
      %p56 = scmp.ne.s32.totalorder %s51, %s53
      %p57 = scmp.eq.s32.totalorder %s17, 0
      %p58 = por %p56, %p57
      %p59 = scmp.ne.s32.totalorder %s51, %s53
      %p60 = scmp.eq.s32.totalorder %s22, 1
      %p61 = por %p59, %p60
      %p62 = scmp.ne.s32.totalorder %s53, %s54
      %p63 = scmp.eq.s32.totalorder %s22, 0
      %p64 = por %p62, %p63
      %p65 = scmp.ne.s32.totalorder %s53, %s54
      %p66 = scmp.eq.s32.totalorder %s23, 1
      %p67 = por %p65, %p66
      %p69 = scmp.ne.s32.totalorder %s54, %s68
      %p70 = scmp.eq.s32.totalorder %s23, 0
      %p71 = por %p69, %p70
      %s73 = sadd.s32 %s72, 1
      %p76 = scmp.eq.s32.totalorder %s17, 1
      %p77 = scmp.ne.s32.totalorder %s72, %s74
      %p78 = scmp.eq.s32.totalorder %s17, 0
      %p79 = por %p77, %p78
      %p80 = scmp.ne.s32.totalorder %s72, %s74
      %p81 = scmp.eq.s32.totalorder %s22, 1
      %p82 = por %p80, %p81
      %p83 = scmp.ne.s32.totalorder %s74, %s75
      %p84 = scmp.eq.s32.totalorder %s22, 0
      %p85 = por %p83, %p84
      %p86 = scmp.ne.s32.totalorder %s74, %s75
      %p87 = scmp.eq.s32.totalorder %s23, 1
      %p88 = por %p86, %p87
      %p90 = scmp.ne.s32.totalorder %s75, %s89
      %p91 = scmp.eq.s32.totalorder %s23, 0
      %p92 = por %p90, %p91
      %s94 = sadd.s32 %s93, 1
      %p97 = scmp.eq.s32.totalorder %s17, 1
      %p98 = scmp.ne.s32.totalorder %s93, %s95
      %p99 = scmp.eq.s32.totalorder %s17, 0
      %p100 = por %p98, %p99
      %p101 = scmp.ne.s32.totalorder %s93, %s95
      %p102 = scmp.eq.s32.totalorder %s22, 1
      %p103 = por %p101, %p102
      %p104 = scmp.ne.s32.totalorder %s95, %s96
      %p105 = scmp.eq.s32.totalorder %s22, 0
      %p106 = por %p104, %p105
      %p107 = scmp.ne.s32.totalorder %s95, %s96
      %p108 = scmp.eq.s32.totalorder %s23, 1
      %p109 = por %p107, %p108
      %p111 = scmp.ne.s32.totalorder %s96, %s110
      %p112 = scmp.eq.s32.totalorder %s23, 0
      %p113 = por %p111, %p112
      %s114 = ssub.s32 %s17, %s24
      %p115 = scmp.eq.s32.totalorder %s114, 0
      %s117 = sadd.s32 %s116, 1
      %s118 = scalar_select %p115, %s116, %s117
      %p121 = pneg %p115
      %p122 = scmp.eq.s32.totalorder %s17, 1
      %p123 = por %p121, %p122
      %p124 = scmp.ne.s32.totalorder %s116, %s119
      %p125 = scmp.eq.s32.totalorder %s17, 0
      %p126 = por %p124, %p125
      %p127 = scmp.ne.s32.totalorder %s116, %s119
      %p128 = scmp.eq.s32.totalorder %s22, 1
      %p129 = por %p127, %p128
      %p130 = scmp.ne.s32.totalorder %s119, %s120
      %p131 = scmp.eq.s32.totalorder %s22, 0
      %p132 = por %p130, %p131
      %p133 = scmp.ne.s32.totalorder %s119, %s120
      %p134 = scmp.eq.s32.totalorder %s23, 1
      %p135 = por %p133, %p134
      %p137 = scmp.ne.s32.totalorder %s120, %s136
      %p138 = scmp.eq.s32.totalorder %s23, 0
      %p139 = por %p137, %p138
      %p140 = scmp.le.s32.totalorder 1, %s17
      %p141 = scmp.lt.s32.totalorder %s17, 3
      %p142 = pnand %p140, %p141
      %p143 = pneg %p142
      // Predicated region
      $region9: #{attention2_forward.1} parent=5 // pred_check
        _
      $region10: #{attention2_forward.1} parent=5 // pred_check_branch
        %145 = sbr.rel (%p142) target = $region12
      $region11: #{attention2_forward.1} parent=5 // pred_region
        %s146 = ssub.s32 %s17, 1
        // Predicated region
        $region13: #{attention2_forward.1} parent=11 // pred_check
          %p147 = pneg %p64
        $region14: #{attention2_forward.1} parent=11 // pred_check_branch
          %149 = sbr.rel (%p147) target = $region16
        $region15: #{attention2_forward.1} parent=11 // pred_region
          %151 = vsyncadd [#allocation6], 0
          %s152 = sshll.u32 %s1, 4
          %s153 = int_to_ptr.hbm [resolvable:$true] %s152
          %s154 = sshll.u32 [#allocation5], 4
          %s155 = int_to_ptr.vmem [resolvable:$true] %s154
          %160 = dma.hbm_to_vmem [thread:$0]  %s153, 2048, %s155, [#allocation6], 256, 256, 16
        $region16: #{attention2_forward.1} parent=11 // pred_fallthru
          _
        // Predicated region
        $region17: #{attention2_forward.1} parent=11 // pred_check
          %p161 = pneg %p85
        $region18: #{attention2_forward.1} parent=11 // pred_check_branch
          %163 = sbr.rel (%p161) target = $region20
        $region19: #{attention2_forward.1} parent=11 // pred_region
          %165 = vsyncadd [#allocation6], 0
          %s166 = sshll.u32 %s2, 4
          %s167 = int_to_ptr.hbm [resolvable:$true] %s166
          %s168 = sshll.u32 [#allocation7], 4
          %s169 = int_to_ptr.vmem [resolvable:$true] %s168
          %174 = dma.hbm_to_vmem [thread:$0]  %s167, 1024, %s169, [#allocation6], 128, 128, 8
        $region20: #{attention2_forward.1} parent=11 // pred_fallthru
          _
        // Predicated region
        $region21: #{attention2_forward.1} parent=11 // pred_check
          %p175 = pneg %p106
        $region22: #{attention2_forward.1} parent=11 // pred_check_branch
          %177 = sbr.rel (%p175) target = $region24
        $region23: #{attention2_forward.1} parent=11 // pred_region
          _
        $region24: #{attention2_forward.1} parent=11 // pred_fallthru
          _
      $region12: #{attention2_forward.1} parent=5 // pred_fallthru
        _
      %p178 = scmp.lt.s32.totalorder %s17, 2
      // Predicated region
      $region25: #{attention2_forward.1} parent=5 // pred_check
        %p179 = pneg %p178
      $region26: #{attention2_forward.1} parent=5 // pred_check_branch
        %181 = sbr.rel (%p179) target = $region28
      $region27: #{attention2_forward.1} parent=5 // pred_region
        // Predicated region
        $region29: #{attention2_forward.1} parent=27 // pred_check
          %p182 = pneg %p37
        $region30: #{attention2_forward.1} parent=27 // pred_check_branch
          %184 = sbr.rel (%p182) target = $region32
        $region31: #{attention2_forward.1} parent=27 // pred_region
          %s185 = sand.u32 %s27, 1
          %s186 = scalar_lea.sflag [#allocation3], %s185
          %s187 = sand.u32 %s27, 1
          %s188 = smul.addr %s187, 64
          %s189 = scalar_lea.vmem [#allocation2], %s188
          %191 = vsyncadd %s186, 0
          %s192 = smul.addr %s17, 8
          %s193 = smul.addr %s192, 8
          %s194 = scalar_lea.hbm %s0, %s193
          %s195 = sshll.u32 %s194, 4
          %s196 = int_to_ptr.hbm [resolvable:$true] %s195
          %s197 = sshll.u32 %s189, 4
          %s198 = int_to_ptr.vmem [resolvable:$true] %s197
          %203 = dma.hbm_to_vmem [thread:$0]  %s196, 1024, %s198, %s186, 128, 128, 8
        $region32: #{attention2_forward.1} parent=27 // pred_fallthru
          _
      $region28: #{attention2_forward.1} parent=5 // pred_fallthru
        _
      %p204 = scmp.le.s32.totalorder 1, %s17
      %p205 = scmp.lt.s32.totalorder %s17, 3
      %p206 = pnand %p204, %p205
      %p207 = pneg %p206
      // Predicated region
      $region33: #{attention2_forward.1} parent=5 // pred_check
        _
      $region34: #{attention2_forward.1} parent=5 // pred_check_branch
        %209 = sbr.rel (%p206) target = $region36
      $region35: #{attention2_forward.1} parent=5 // pred_region
        %s210 = ssub.s32 %s17, 1
        %s211 = sand.u32 %s30, 1
        %s212 = scalar_lea.sflag [#allocation3], %s211
        %s213 = sand.u32 %s30, 1
        %s214 = smul.addr %s213, 64
        %s215 = scalar_lea.vmem [#allocation2], %s214
        // Predicated region
        $region37: #{attention2_forward.1} parent=35 // pred_check
          %p216 = pneg %p43
        $region38: #{attention2_forward.1} parent=35 // pred_check_branch
          %218 = sbr.rel (%p216) target = $region40
        $region39: #{attention2_forward.1} parent=35 // pred_region
          %220 = dma.done %s212, 1024
        $region40: #{attention2_forward.1} parent=35 // pred_fallthru
          _
        // Predicated region
        $region41: #{attention2_forward.1} parent=35 // pred_check
          %p221 = pneg %p64
        $region42: #{attention2_forward.1} parent=35 // pred_check_branch
          %223 = sbr.rel (%p221) target = $region44
        $region43: #{attention2_forward.1} parent=35 // pred_region
          %225 = dma.done [#allocation6], 2048
        $region44: #{attention2_forward.1} parent=35 // pred_fallthru
          _
        // Predicated region
        $region45: #{attention2_forward.1} parent=35 // pred_check
          %p226 = pneg %p85
        $region46: #{attention2_forward.1} parent=35 // pred_check_branch
          %228 = sbr.rel (%p226) target = $region48
        $region47: #{attention2_forward.1} parent=35 // pred_region
          %230 = dma.done [#allocation6], 1024
        $region48: #{attention2_forward.1} parent=35 // pred_fallthru
          _
        %s231 = sand.u32 %s30, 1
        %s232 = scalar_lea.sflag [#allocation3], %s231
        %s233 = sand.u32 %s30, 1
        %s234 = smul.addr %s233, 64
        %s235 = scalar_lea.vmem [#allocation2], %s234
        %p236 = pneg %p43
        %p237 = pneg %p40
        %p238 = pneg %p64
        %p239 = pneg %p61
        %p240 = pneg %p85
        %p241 = pneg %p82
        %p242 = pneg %p106
        %p243 = pneg %p103
        %p244 = pneg %p132
        %p245 = pneg %p129
        %s246 = sand.u32 %s119, 1
        %s247 = scalar_lea.sflag [#allocation4], %s246
        %s248 = sand.u32 %s119, 1
        %s249 = smul.addr %s248, 64
        %s250 = scalar_lea.vmem [#allocation8], %s249
        %v251 = vld [vmem:[%s215] sm:$0xff]
        %v252 = vld [vmem:[%s215 + $0x8] sm:$0xff]
        %v253 = vld [vmem:[%s215 + $0x10] sm:$0xff]
        %v254 = vld [vmem:[%s215 + $0x18] sm:$0xff]
        %v255 = vld [vmem:[%s215 + $0x20] sm:$0xff]
        %v256 = vld [vmem:[%s215 + $0x28] sm:$0xff]
        %v257 = vld [vmem:[%s215 + $0x30] sm:$0xff]
        %v258 = vld [vmem:[%s215 + $0x38] sm:$0xff]
        %v259 = vld [vmem:[#allocation5] sm:$0xff]
        %v260 = vld [vmem:[#allocation5 + $0x8] sm:$0xff]
        %v261 = vld [vmem:[#allocation5 + $0x10] sm:$0xff]
        %v262 = vld [vmem:[#allocation5 + $0x18] sm:$0xff]
        %v263 = vld [vmem:[#allocation5 + $0x20] sm:$0xff]
        %v264 = vld [vmem:[#allocation5 + $0x28] sm:$0xff]
        %v265 = vld [vmem:[#allocation5 + $0x30] sm:$0xff]
        %v266 = vld [vmem:[#allocation5 + $0x38] sm:$0xff]
        %v267 = vld [vmem:[#allocation5 + $0x40] sm:$0xff]
        %v268 = vld [vmem:[#allocation5 + $0x48] sm:$0xff]
        %v269 = vld [vmem:[#allocation5 + $0x50] sm:$0xff]
        %v270 = vld [vmem:[#allocation5 + $0x58] sm:$0xff]
        %v271 = vld [vmem:[#allocation5 + $0x60] sm:$0xff]
        %v272 = vld [vmem:[#allocation5 + $0x68] sm:$0xff]
        %v273 = vld [vmem:[#allocation5 + $0x70] sm:$0xff]
        %v274 = vld [vmem:[#allocation5 + $0x78] sm:$0xff]
        %vm275 = vcmask 523264
        %v277 = vsel %vm275, %v251, 0
        %v280 = vsel %vm275, %v252, 0
        %v283 = vsel %vm275, %v253, 0
        %v286 = vsel %vm275, %v254, 0
        %v289 = vsel %vm275, %v255, 0
        %v292 = vsel %vm275, %v256, 0
        %v295 = vsel %vm275, %v257, 0
        %v298 = vsel %vm275, %v258, 0
        %300 = vmatpush.msra.mxu0 0.0
        %301 = vmatpush.msra.mxu0 0.0
        %302 = vmatpush.msra.mxu0 0.0
        %303 = vmatpush.msra.mxu0 0.0
        %304 = vmatpush.msra.mxu0 0.0
        %305 = vmatpush.msra.mxu0 0.0
        %306 = vmatpush.msra.mxu0 0.0
        %307 = vmatpush.msra.mxu0 0.0
        %308 = vmatpush.msra.mxu0 %v273
        %309 = vmatpush.msra.mxu0 %v271
        %310 = vmatpush.msra.mxu0 %v269
        %311 = vmatpush.msra.mxu0 %v267
        %312 = vmatpush.msra.mxu0 %v265
        %313 = vmatpush.msra.mxu0 %v263
        %314 = vmatpush.msra.mxu0 %v261
        %315 = vmatpush.msra.mxu0 %v259
        %316 = vmatmul.f32.gmra.mxu0 %v277
        %v317 = vpop.f32.mrf.mxu0
        %v318 = vadd.f32 0.0, %v317
        %319 = vmatmul.f32.gmra.mxu0 %v280
        %v320 = vpop.f32.mrf.mxu0
        %v321 = vadd.f32 0.0, %v320
        %322 = vmatmul.f32.gmra.mxu0 %v283
        %v323 = vpop.f32.mrf.mxu0
        %v324 = vadd.f32 0.0, %v323
        %325 = vmatmul.f32.gmra.mxu0 %v286
        %v326 = vpop.f32.mrf.mxu0
        %v327 = vadd.f32 0.0, %v326
        %328 = vmatmul.f32.gmra.mxu0 %v289
        %v329 = vpop.f32.mrf.mxu0
        %v330 = vadd.f32 0.0, %v329
        %331 = vmatmul.f32.gmra.mxu0 %v292
        %v332 = vpop.f32.mrf.mxu0
        %v333 = vadd.f32 0.0, %v332
        %334 = vmatmul.f32.gmra.mxu0 %v295
        %v335 = vpop.f32.mrf.mxu0
        %v336 = vadd.f32 0.0, %v335
        %337 = vmatmul.f32.gmra.mxu0 %v298
        %v338 = vpop.f32.mrf.mxu0
        %v339 = vadd.f32 0.0, %v338
        %340 = vdwg.mxu0
        %341 = vmatpush.msra.mxu0 0.0
        %342 = vmatpush.msra.mxu0 0.0
        %343 = vmatpush.msra.mxu0 0.0
        %344 = vmatpush.msra.mxu0 0.0
        %345 = vmatpush.msra.mxu0 0.0
        %346 = vmatpush.msra.mxu0 0.0
        %347 = vmatpush.msra.mxu0 0.0
        %348 = vmatpush.msra.mxu0 0.0
        %349 = vmatpush.msra.mxu0 %v274
        %350 = vmatpush.msra.mxu0 %v272
        %351 = vmatpush.msra.mxu0 %v270
        %352 = vmatpush.msra.mxu0 %v268
        %353 = vmatpush.msra.mxu0 %v266
        %354 = vmatpush.msra.mxu0 %v264
        %355 = vmatpush.msra.mxu0 %v262
        %356 = vmatpush.msra.mxu0 %v260
        %357 = vmatmul.f32.gmra.mxu0 %v277
        %v358 = vpop.f32.mrf.mxu0
        %v359 = vadd.f32 0.0, %v358
        %360 = vmatmul.f32.gmra.mxu0 %v280
        %v361 = vpop.f32.mrf.mxu0
        %v362 = vadd.f32 0.0, %v361
        %363 = vmatmul.f32.gmra.mxu0 %v283
        %v364 = vpop.f32.mrf.mxu0
        %v365 = vadd.f32 0.0, %v364
        %366 = vmatmul.f32.gmra.mxu0 %v286
        %v367 = vpop.f32.mrf.mxu0
        %v368 = vadd.f32 0.0, %v367
        %369 = vmatmul.f32.gmra.mxu0 %v289
        %v370 = vpop.f32.mrf.mxu0
        %v371 = vadd.f32 0.0, %v370
        %372 = vmatmul.f32.gmra.mxu0 %v292
        %v373 = vpop.f32.mrf.mxu0
        %v374 = vadd.f32 0.0, %v373
        %375 = vmatmul.f32.gmra.mxu0 %v295
        %v376 = vpop.f32.mrf.mxu0
        %v377 = vadd.f32 0.0, %v376
        %378 = vmatmul.f32.gmra.mxu0 %v298
        %v379 = vpop.f32.mrf.mxu0
        %v380 = vadd.f32 0.0, %v379
        %381 = vdwg.mxu0
        %390 = vrot.lane.b32.xlu0 %v318, 64
        %v391 = vpop.permute.xlu0 %390
        %392 = vrot.lane.b32.xlu0 %v321, 64
        %v393 = vpop.permute.xlu0 %392
        %394 = vrot.lane.b32.xlu0 %v324, 64
        %v395 = vpop.permute.xlu0 %394
        %396 = vrot.lane.b32.xlu0 %v327, 64
        %v397 = vpop.permute.xlu0 %396
        %398 = vrot.lane.b32.xlu0 %v330, 64
        %v399 = vpop.permute.xlu0 %398
        %400 = vrot.lane.b32.xlu0 %v333, 64
        %v401 = vpop.permute.xlu0 %400
        %402 = vrot.lane.b32.xlu0 %v336, 64
        %v403 = vpop.permute.xlu0 %402
        %404 = vrot.lane.b32.xlu0 %v339, 64
        %v405 = vpop.permute.xlu0 %404
        %vm406 = vcmask 64512
        %v407 = vsel %vm406, %v318, 0
        %v409 = vsel %vm406, %v321, 0
        %v411 = vsel %vm406, %v324, 0
        %v413 = vsel %vm406, %v327, 0
        %v415 = vsel %vm406, %v330, 0
        %v417 = vsel %vm406, %v333, 0
        %v419 = vsel %vm406, %v336, 0
        %v421 = vsel %vm406, %v339, 0
        %v423 = vsel %vm406, %v391, 0
        %v425 = vsel %vm406, %v393, 0
        %v427 = vsel %vm406, %v395, 0
        %v429 = vsel %vm406, %v397, 0
        %v431 = vsel %vm406, %v399, 0
        %v433 = vsel %vm406, %v401, 0
        %v435 = vsel %vm406, %v403, 0
        %v437 = vsel %vm406, %v405, 0
        %439 = vmatpush.xpose.msra.mxu0 0.0
        %440 = vmatpush.xpose.msra.mxu0 0.0
        %441 = vmatpush.xpose.msra.mxu0 0.0
        %442 = vmatpush.xpose.msra.mxu0 0.0
        %443 = vmatpush.xpose.msra.mxu0 0.0
        %444 = vmatpush.xpose.msra.mxu0 0.0
        %445 = vmatpush.xpose.msra.mxu0 0.0
        %446 = vmatpush.xpose.msra.mxu0 0.0
        %447 = vmatpush.xpose.msra.mxu0 %v437
        %448 = vmatpush.xpose.msra.mxu0 %v435
        %449 = vmatpush.xpose.msra.mxu0 %v433
        %450 = vmatpush.xpose.msra.mxu0 %v431
        %451 = vmatpush.xpose.msra.mxu0 %v429
        %452 = vmatpush.xpose.msra.mxu0 %v427
        %453 = vmatpush.xpose.msra.mxu0 %v425
        %454 = vmatpush.xpose.msra.mxu0 %v423
        %455 = vmatmul.f32.gmra.mxu0 %v407
        %v456 = vpop.f32.mrf.mxu0
        %v457 = vadd.f32 0.0, %v456
        %458 = vmatmul.f32.gmra.mxu0 %v409
        %v459 = vpop.f32.mrf.mxu0
        %v460 = vadd.f32 0.0, %v459
        %461 = vmatmul.f32.gmra.mxu0 %v411
        %v462 = vpop.f32.mrf.mxu0
        %v463 = vadd.f32 0.0, %v462
        %464 = vmatmul.f32.gmra.mxu0 %v413
        %v465 = vpop.f32.mrf.mxu0
        %v466 = vadd.f32 0.0, %v465
        %467 = vmatmul.f32.gmra.mxu0 %v415
        %v468 = vpop.f32.mrf.mxu0
        %v469 = vadd.f32 0.0, %v468
        %470 = vmatmul.f32.gmra.mxu0 %v417
        %v471 = vpop.f32.mrf.mxu0
        %v472 = vadd.f32 0.0, %v471
        %473 = vmatmul.f32.gmra.mxu0 %v419
        %v474 = vpop.f32.mrf.mxu0
        %v475 = vadd.f32 0.0, %v474
        %476 = vmatmul.f32.gmra.mxu0 %v421
        %v477 = vpop.f32.mrf.mxu0
        %v478 = vadd.f32 0.0, %v477
        %479 = vdwg.mxu0
        %v480 = vsel %vm275, %v457, -inf
        %481 = vmax.xlane.f32.xlu0 %v480
        %v482 = vpop.xlane.xlu0 %481
        %v483 = vsel %vm275, %v460, -inf
        %484 = vmax.xlane.f32.xlu0 %v483
        %v485 = vpop.xlane.xlu0 %484
        %v486 = vsel %vm275, %v463, -inf
        %487 = vmax.xlane.f32.xlu0 %v486
        %v488 = vpop.xlane.xlu0 %487
        %v489 = vsel %vm275, %v466, -inf
        %490 = vmax.xlane.f32.xlu0 %v489
        %v491 = vpop.xlane.xlu0 %490
        %v492 = vsel %vm275, %v469, -inf
        %493 = vmax.xlane.f32.xlu0 %v492
        %v494 = vpop.xlane.xlu0 %493
        %v495 = vsel %vm275, %v472, -inf
        %496 = vmax.xlane.f32.xlu0 %v495
        %v497 = vpop.xlane.xlu0 %496
        %v498 = vsel %vm275, %v475, -inf
        %499 = vmax.xlane.f32.xlu0 %v498
        %v500 = vpop.xlane.xlu0 %499
        %v501 = vsel %vm275, %v478, -inf
        %502 = vmax.xlane.f32.xlu0 %v501
        %v503 = vpop.xlane.xlu0 %502
        %v504 = vsub.f32 %v457, %v482
        %v505 = vsub.f32 %v460, %v485
        %v506 = vsub.f32 %v463, %v488
        %v507 = vsub.f32 %v466, %v491
        %v508 = vsub.f32 %v469, %v494
        %v509 = vsub.f32 %v472, %v497
        %v510 = vsub.f32 %v475, %v500
        %v511 = vsub.f32 %v478, %v503
        %v512 = vmul.f32 %v504, 1.442695
        %v513 = vpow.pop %v512
        %v514 = vmul.f32 %v505, 1.442695
        %v515 = vpow.pop %v514
        %v516 = vmul.f32 %v506, 1.442695
        %v517 = vpow.pop %v516
        %v518 = vmul.f32 %v507, 1.442695
        %v519 = vpow.pop %v518
        %v520 = vmul.f32 %v508, 1.442695
        %v521 = vpow.pop %v520
        %v522 = vmul.f32 %v509, 1.442695
        %v523 = vpow.pop %v522
        %v524 = vmul.f32 %v510, 1.442695
        %v525 = vpow.pop %v524
        %v526 = vmul.f32 %v511, 1.442695
        %v527 = vpow.pop %v526
        %v528 = vsel %vm275, %v513, 0.0
        %529 = vadd.xlane.f32.xlu0 %v528
        %v530 = vpop.xlane.xlu0 %529
        %v531 = vsel %vm275, %v515, 0.0
        %532 = vadd.xlane.f32.xlu0 %v531
        %v533 = vpop.xlane.xlu0 %532
        %v534 = vsel %vm275, %v517, 0.0
        %535 = vadd.xlane.f32.xlu0 %v534
        %v536 = vpop.xlane.xlu0 %535
        %v537 = vsel %vm275, %v519, 0.0
        %538 = vadd.xlane.f32.xlu0 %v537
        %v539 = vpop.xlane.xlu0 %538
        %v540 = vsel %vm275, %v521, 0.0
        %541 = vadd.xlane.f32.xlu0 %v540
        %v542 = vpop.xlane.xlu0 %541
        %v543 = vsel %vm275, %v523, 0.0
        %544 = vadd.xlane.f32.xlu0 %v543
        %v545 = vpop.xlane.xlu0 %544
        %v546 = vsel %vm275, %v525, 0.0
        %547 = vadd.xlane.f32.xlu0 %v546
        %v548 = vpop.xlane.xlu0 %547
        %v549 = vsel %vm275, %v527, 0.0
        %550 = vadd.xlane.f32.xlu0 %v549
        %v551 = vpop.xlane.xlu0 %550
        %v552 = vrcp.pop %v530
        %v553 = vrcp.pop %v533
        %v554 = vrcp.pop %v536
        %v555 = vrcp.pop %v539
        %v556 = vrcp.pop %v542
        %v557 = vrcp.pop %v545
        %v558 = vrcp.pop %v548
        %v559 = vrcp.pop %v551
        %v560 = vmul.f32 %v513, %v552
        %v561 = vmul.f32 %v515, %v553
        %v562 = vmul.f32 %v517, %v554
        %v563 = vmul.f32 %v519, %v555
        %v564 = vmul.f32 %v521, %v556
        %v565 = vmul.f32 %v523, %v557
        %v566 = vmul.f32 %v525, %v558
        %v567 = vmul.f32 %v527, %v559
        %v569 = vsel %vm275, %v560, 0
        %v572 = vsel %vm275, %v561, 0
        %v575 = vsel %vm275, %v562, 0
        %v578 = vsel %vm275, %v563, 0
        %v581 = vsel %vm275, %v564, 0
        %v584 = vsel %vm275, %v565, 0
        %v587 = vsel %vm275, %v566, 0
        %v590 = vsel %vm275, %v567, 0
        %592 = vmatpush.msra.mxu0 0.0
        %593 = vmatpush.msra.mxu0 0.0
        %594 = vmatpush.msra.mxu0 0.0
        %595 = vmatpush.msra.mxu0 0.0
        %596 = vmatpush.msra.mxu0 0.0
        %597 = vmatpush.msra.mxu0 0.0
        %598 = vmatpush.msra.mxu0 0.0
        %599 = vmatpush.msra.mxu0 0.0
        %600 = vmatpush.msra.mxu0 %v380
        %601 = vmatpush.msra.mxu0 %v377
        %602 = vmatpush.msra.mxu0 %v374
        %603 = vmatpush.msra.mxu0 %v371
        %604 = vmatpush.msra.mxu0 %v368
        %605 = vmatpush.msra.mxu0 %v365
        %606 = vmatpush.msra.mxu0 %v362
        %607 = vmatpush.msra.mxu0 %v359
        %608 = vmatmul.f32.gmra.mxu0 %v569
        %v609 = vpop.f32.mrf.mxu0
        %v610 = vadd.f32 0.0, %v609
        %611 = vmatmul.f32.gmra.mxu0 %v572
        %v612 = vpop.f32.mrf.mxu0
        %v613 = vadd.f32 0.0, %v612
        %614 = vmatmul.f32.gmra.mxu0 %v575
        %v615 = vpop.f32.mrf.mxu0
        %v616 = vadd.f32 0.0, %v615
        %617 = vmatmul.f32.gmra.mxu0 %v578
        %v618 = vpop.f32.mrf.mxu0
        %v619 = vadd.f32 0.0, %v618
        %620 = vmatmul.f32.gmra.mxu0 %v581
        %v621 = vpop.f32.mrf.mxu0
        %v622 = vadd.f32 0.0, %v621
        %623 = vmatmul.f32.gmra.mxu0 %v584
        %v624 = vpop.f32.mrf.mxu0
        %v625 = vadd.f32 0.0, %v624
        %626 = vmatmul.f32.gmra.mxu0 %v587
        %v627 = vpop.f32.mrf.mxu0
        %v628 = vadd.f32 0.0, %v627
        %629 = vmatmul.f32.gmra.mxu0 %v590
        %v630 = vpop.f32.mrf.mxu0
        %v631 = vadd.f32 0.0, %v630
        %632 = vdwg.mxu0
        %633 = vrot.lane.b32.xlu0 %v318, 120
        %v634 = vpop.permute.xlu0 %633
        %635 = vrot.lane.b32.xlu0 %v321, 120
        %v636 = vpop.permute.xlu0 %635
        %637 = vrot.lane.b32.xlu0 %v324, 120
        %v638 = vpop.permute.xlu0 %637
        %639 = vrot.lane.b32.xlu0 %v327, 120
        %v640 = vpop.permute.xlu0 %639
        %641 = vrot.lane.b32.xlu0 %v330, 120
        %v642 = vpop.permute.xlu0 %641
        %643 = vrot.lane.b32.xlu0 %v333, 120
        %v644 = vpop.permute.xlu0 %643
        %645 = vrot.lane.b32.xlu0 %v336, 120
        %v646 = vpop.permute.xlu0 %645
        %647 = vrot.lane.b32.xlu0 %v339, 120
        %v648 = vpop.permute.xlu0 %647
        %649 = vrot.lane.b32.xlu0 %v318, 56
        %v650 = vpop.permute.xlu0 %649
        %651 = vrot.lane.b32.xlu0 %v321, 56
        %v652 = vpop.permute.xlu0 %651
        %653 = vrot.lane.b32.xlu0 %v324, 56
        %v654 = vpop.permute.xlu0 %653
        %655 = vrot.lane.b32.xlu0 %v327, 56
        %v656 = vpop.permute.xlu0 %655
        %657 = vrot.lane.b32.xlu0 %v330, 56
        %v658 = vpop.permute.xlu0 %657
        %659 = vrot.lane.b32.xlu0 %v333, 56
        %v660 = vpop.permute.xlu0 %659
        %661 = vrot.lane.b32.xlu0 %v336, 56
        %v662 = vpop.permute.xlu0 %661
        %663 = vrot.lane.b32.xlu0 %v339, 56
        %v664 = vpop.permute.xlu0 %663
        %v665 = vsel %vm406, %v634, 0
        %v667 = vsel %vm406, %v636, 0
        %v669 = vsel %vm406, %v638, 0
        %v671 = vsel %vm406, %v640, 0
        %v673 = vsel %vm406, %v642, 0
        %v675 = vsel %vm406, %v644, 0
        %v677 = vsel %vm406, %v646, 0
        %v679 = vsel %vm406, %v648, 0
        %v681 = vsel %vm406, %v650, 0
        %v683 = vsel %vm406, %v652, 0
        %v685 = vsel %vm406, %v654, 0
        %v687 = vsel %vm406, %v656, 0
        %v689 = vsel %vm406, %v658, 0
        %v691 = vsel %vm406, %v660, 0
        %v693 = vsel %vm406, %v662, 0
        %v695 = vsel %vm406, %v664, 0
        %697 = vmatpush.xpose.msra.mxu0 0.0
        %698 = vmatpush.xpose.msra.mxu0 0.0
        %699 = vmatpush.xpose.msra.mxu0 0.0
        %700 = vmatpush.xpose.msra.mxu0 0.0
        %701 = vmatpush.xpose.msra.mxu0 0.0
        %702 = vmatpush.xpose.msra.mxu0 0.0
        %703 = vmatpush.xpose.msra.mxu0 0.0
        %704 = vmatpush.xpose.msra.mxu0 0.0
        %705 = vmatpush.xpose.msra.mxu0 %v695
        %706 = vmatpush.xpose.msra.mxu0 %v693
        %707 = vmatpush.xpose.msra.mxu0 %v691
        %708 = vmatpush.xpose.msra.mxu0 %v689
        %709 = vmatpush.xpose.msra.mxu0 %v687
        %710 = vmatpush.xpose.msra.mxu0 %v685
        %711 = vmatpush.xpose.msra.mxu0 %v683
        %712 = vmatpush.xpose.msra.mxu0 %v681
        %713 = vmatmul.f32.gmra.mxu0 %v665
        %v714 = vpop.f32.mrf.mxu0
        %v715 = vadd.f32 0.0, %v714
        %716 = vmatmul.f32.gmra.mxu0 %v667
        %v717 = vpop.f32.mrf.mxu0
        %v718 = vadd.f32 0.0, %v717
        %719 = vmatmul.f32.gmra.mxu0 %v669
        %v720 = vpop.f32.mrf.mxu0
        %v721 = vadd.f32 0.0, %v720
        %722 = vmatmul.f32.gmra.mxu0 %v671
        %v723 = vpop.f32.mrf.mxu0
        %v724 = vadd.f32 0.0, %v723
        %725 = vmatmul.f32.gmra.mxu0 %v673
        %v726 = vpop.f32.mrf.mxu0
        %v727 = vadd.f32 0.0, %v726
        %728 = vmatmul.f32.gmra.mxu0 %v675
        %v729 = vpop.f32.mrf.mxu0
        %v730 = vadd.f32 0.0, %v729
        %731 = vmatmul.f32.gmra.mxu0 %v677
        %v732 = vpop.f32.mrf.mxu0
        %v733 = vadd.f32 0.0, %v732
        %734 = vmatmul.f32.gmra.mxu0 %v679
        %v735 = vpop.f32.mrf.mxu0
        %v736 = vadd.f32 0.0, %v735
        %737 = vdwg.mxu0
        %v738 = vsel %vm275, %v715, -inf
        %739 = vmax.xlane.f32.xlu0 %v738
        %v740 = vpop.xlane.xlu0 %739
        %v741 = vsel %vm275, %v718, -inf
        %742 = vmax.xlane.f32.xlu0 %v741
        %v743 = vpop.xlane.xlu0 %742
        %v744 = vsel %vm275, %v721, -inf
        %745 = vmax.xlane.f32.xlu0 %v744
        %v746 = vpop.xlane.xlu0 %745
        %v747 = vsel %vm275, %v724, -inf
        %748 = vmax.xlane.f32.xlu0 %v747
        %v749 = vpop.xlane.xlu0 %748
        %v750 = vsel %vm275, %v727, -inf
        %751 = vmax.xlane.f32.xlu0 %v750
        %v752 = vpop.xlane.xlu0 %751
        %v753 = vsel %vm275, %v730, -inf
        %754 = vmax.xlane.f32.xlu0 %v753
        %v755 = vpop.xlane.xlu0 %754
        %v756 = vsel %vm275, %v733, -inf
        %757 = vmax.xlane.f32.xlu0 %v756
        %v758 = vpop.xlane.xlu0 %757
        %v759 = vsel %vm275, %v736, -inf
        %760 = vmax.xlane.f32.xlu0 %v759
        %v761 = vpop.xlane.xlu0 %760
        %v762 = vsub.f32 %v715, %v740
        %v763 = vsub.f32 %v718, %v743
        %v764 = vsub.f32 %v721, %v746
        %v765 = vsub.f32 %v724, %v749
        %v766 = vsub.f32 %v727, %v752
        %v767 = vsub.f32 %v730, %v755
        %v768 = vsub.f32 %v733, %v758
        %v769 = vsub.f32 %v736, %v761
        %v770 = vmul.f32 %v762, 1.442695
        %v771 = vpow.pop %v770
        %v772 = vmul.f32 %v763, 1.442695
        %v773 = vpow.pop %v772
        %v774 = vmul.f32 %v764, 1.442695
        %v775 = vpow.pop %v774
        %v776 = vmul.f32 %v765, 1.442695
        %v777 = vpow.pop %v776
        %v778 = vmul.f32 %v766, 1.442695
        %v779 = vpow.pop %v778
        %v780 = vmul.f32 %v767, 1.442695
        %v781 = vpow.pop %v780
        %v782 = vmul.f32 %v768, 1.442695
        %v783 = vpow.pop %v782
        %v784 = vmul.f32 %v769, 1.442695
        %v785 = vpow.pop %v784
        %v786 = vsel %vm275, %v771, 0.0
        %787 = vadd.xlane.f32.xlu0 %v786
        %v788 = vpop.xlane.xlu0 %787
        %v789 = vsel %vm275, %v773, 0.0
        %790 = vadd.xlane.f32.xlu0 %v789
        %v791 = vpop.xlane.xlu0 %790
        %v792 = vsel %vm275, %v775, 0.0
        %793 = vadd.xlane.f32.xlu0 %v792
        %v794 = vpop.xlane.xlu0 %793
        %v795 = vsel %vm275, %v777, 0.0
        %796 = vadd.xlane.f32.xlu0 %v795
        %v797 = vpop.xlane.xlu0 %796
        %v798 = vsel %vm275, %v779, 0.0
        %799 = vadd.xlane.f32.xlu0 %v798
        %v800 = vpop.xlane.xlu0 %799
        %v801 = vsel %vm275, %v781, 0.0
        %802 = vadd.xlane.f32.xlu0 %v801
        %v803 = vpop.xlane.xlu0 %802
        %v804 = vsel %vm275, %v783, 0.0
        %805 = vadd.xlane.f32.xlu0 %v804
        %v806 = vpop.xlane.xlu0 %805
        %v807 = vsel %vm275, %v785, 0.0
        %808 = vadd.xlane.f32.xlu0 %v807
        %v809 = vpop.xlane.xlu0 %808
        %v810 = vrcp.pop %v788
        %v811 = vrcp.pop %v791
        %v812 = vrcp.pop %v794
        %v813 = vrcp.pop %v797
        %v814 = vrcp.pop %v800
        %v815 = vrcp.pop %v803
        %v816 = vrcp.pop %v806
        %v817 = vrcp.pop %v809
        %v818 = vmul.f32 %v771, %v810
        %v819 = vmul.f32 %v773, %v811
        %v820 = vmul.f32 %v775, %v812
        %v821 = vmul.f32 %v777, %v813
        %v822 = vmul.f32 %v779, %v814
        %v823 = vmul.f32 %v781, %v815
        %v824 = vmul.f32 %v783, %v816
        %v825 = vmul.f32 %v785, %v817
        %834 = vrot.lane.b32.xlu0 %v359, 120
        %v835 = vpop.permute.xlu0 %834
        %836 = vrot.lane.b32.xlu0 %v362, 120
        %v837 = vpop.permute.xlu0 %836
        %838 = vrot.lane.b32.xlu0 %v365, 120
        %v839 = vpop.permute.xlu0 %838
        %840 = vrot.lane.b32.xlu0 %v368, 120
        %v841 = vpop.permute.xlu0 %840
        %842 = vrot.lane.b32.xlu0 %v371, 120
        %v843 = vpop.permute.xlu0 %842
        %844 = vrot.lane.b32.xlu0 %v374, 120
        %v845 = vpop.permute.xlu0 %844
        %846 = vrot.lane.b32.xlu0 %v377, 120
        %v847 = vpop.permute.xlu0 %846
        %848 = vrot.lane.b32.xlu0 %v380, 120
        %v849 = vpop.permute.xlu0 %848
        %v859 = vsel %vm275, %v818, 0
        %v862 = vsel %vm275, %v819, 0
        %v865 = vsel %vm275, %v820, 0
        %v868 = vsel %vm275, %v821, 0
        %v871 = vsel %vm275, %v822, 0
        %v874 = vsel %vm275, %v823, 0
        %v877 = vsel %vm275, %v824, 0
        %v880 = vsel %vm275, %v825, 0
        %882 = vmatpush.msra.mxu0 0.0
        %883 = vmatpush.msra.mxu0 0.0
        %884 = vmatpush.msra.mxu0 0.0
        %885 = vmatpush.msra.mxu0 0.0
        %886 = vmatpush.msra.mxu0 0.0
        %887 = vmatpush.msra.mxu0 0.0
        %888 = vmatpush.msra.mxu0 0.0
        %889 = vmatpush.msra.mxu0 0.0
        %890 = vmatpush.msra.mxu0 %v849
        %891 = vmatpush.msra.mxu0 %v847
        %892 = vmatpush.msra.mxu0 %v845
        %893 = vmatpush.msra.mxu0 %v843
        %894 = vmatpush.msra.mxu0 %v841
        %895 = vmatpush.msra.mxu0 %v839
        %896 = vmatpush.msra.mxu0 %v837
        %897 = vmatpush.msra.mxu0 %v835
        %898 = vmatmul.f32.gmra.mxu0 %v859
        %v899 = vpop.f32.mrf.mxu0
        %v900 = vadd.f32 0.0, %v899
        %901 = vmatmul.f32.gmra.mxu0 %v862
        %v902 = vpop.f32.mrf.mxu0
        %v903 = vadd.f32 0.0, %v902
        %904 = vmatmul.f32.gmra.mxu0 %v865
        %v905 = vpop.f32.mrf.mxu0
        %v906 = vadd.f32 0.0, %v905
        %907 = vmatmul.f32.gmra.mxu0 %v868
        %v908 = vpop.f32.mrf.mxu0
        %v909 = vadd.f32 0.0, %v908
        %910 = vmatmul.f32.gmra.mxu0 %v871
        %v911 = vpop.f32.mrf.mxu0
        %v912 = vadd.f32 0.0, %v911
        %913 = vmatmul.f32.gmra.mxu0 %v874
        %v914 = vpop.f32.mrf.mxu0
        %v915 = vadd.f32 0.0, %v914
        %916 = vmatmul.f32.gmra.mxu0 %v877
        %v917 = vpop.f32.mrf.mxu0
        %v918 = vadd.f32 0.0, %v917
        %919 = vmatmul.f32.gmra.mxu0 %v880
        %v920 = vpop.f32.mrf.mxu0
        %v921 = vadd.f32 0.0, %v920
        %922 = vdwg.mxu0
        %923 = vrot.lane.b32.xlu0 %v318, 112
        %v924 = vpop.permute.xlu0 %923
        %925 = vrot.lane.b32.xlu0 %v321, 112
        %v926 = vpop.permute.xlu0 %925
        %927 = vrot.lane.b32.xlu0 %v324, 112
        %v928 = vpop.permute.xlu0 %927
        %929 = vrot.lane.b32.xlu0 %v327, 112
        %v930 = vpop.permute.xlu0 %929
        %931 = vrot.lane.b32.xlu0 %v330, 112
        %v932 = vpop.permute.xlu0 %931
        %933 = vrot.lane.b32.xlu0 %v333, 112
        %v934 = vpop.permute.xlu0 %933
        %935 = vrot.lane.b32.xlu0 %v336, 112
        %v936 = vpop.permute.xlu0 %935
        %937 = vrot.lane.b32.xlu0 %v339, 112
        %v938 = vpop.permute.xlu0 %937
        %939 = vrot.lane.b32.xlu0 %v318, 48
        %v940 = vpop.permute.xlu0 %939
        %941 = vrot.lane.b32.xlu0 %v321, 48
        %v942 = vpop.permute.xlu0 %941
        %943 = vrot.lane.b32.xlu0 %v324, 48
        %v944 = vpop.permute.xlu0 %943
        %945 = vrot.lane.b32.xlu0 %v327, 48
        %v946 = vpop.permute.xlu0 %945
        %947 = vrot.lane.b32.xlu0 %v330, 48
        %v948 = vpop.permute.xlu0 %947
        %949 = vrot.lane.b32.xlu0 %v333, 48
        %v950 = vpop.permute.xlu0 %949
        %951 = vrot.lane.b32.xlu0 %v336, 48
        %v952 = vpop.permute.xlu0 %951
        %953 = vrot.lane.b32.xlu0 %v339, 48
        %v954 = vpop.permute.xlu0 %953
        %v955 = vsel %vm406, %v924, 0
        %v957 = vsel %vm406, %v926, 0
        %v959 = vsel %vm406, %v928, 0
        %v961 = vsel %vm406, %v930, 0
        %v963 = vsel %vm406, %v932, 0
        %v965 = vsel %vm406, %v934, 0
        %v967 = vsel %vm406, %v936, 0
        %v969 = vsel %vm406, %v938, 0
        %v971 = vsel %vm406, %v940, 0
        %v973 = vsel %vm406, %v942, 0
        %v975 = vsel %vm406, %v944, 0
        %v977 = vsel %vm406, %v946, 0
        %v979 = vsel %vm406, %v948, 0
        %v981 = vsel %vm406, %v950, 0
        %v983 = vsel %vm406, %v952, 0
        %v985 = vsel %vm406, %v954, 0
        %987 = vmatpush.xpose.msra.mxu0 0.0
        %988 = vmatpush.xpose.msra.mxu0 0.0
        %989 = vmatpush.xpose.msra.mxu0 0.0
        %990 = vmatpush.xpose.msra.mxu0 0.0
        %991 = vmatpush.xpose.msra.mxu0 0.0
        %992 = vmatpush.xpose.msra.mxu0 0.0
        %993 = vmatpush.xpose.msra.mxu0 0.0
        %994 = vmatpush.xpose.msra.mxu0 0.0
        %995 = vmatpush.xpose.msra.mxu0 %v985
        %996 = vmatpush.xpose.msra.mxu0 %v983
        %997 = vmatpush.xpose.msra.mxu0 %v981
        %998 = vmatpush.xpose.msra.mxu0 %v979
        %999 = vmatpush.xpose.msra.mxu0 %v977
        %1000 = vmatpush.xpose.msra.mxu0 %v975
        %1001 = vmatpush.xpose.msra.mxu0 %v973
        %1002 = vmatpush.xpose.msra.mxu0 %v971
        %1003 = vmatmul.f32.gmra.mxu0 %v955
        %v1004 = vpop.f32.mrf.mxu0
        %v1005 = vadd.f32 0.0, %v1004
        %1006 = vmatmul.f32.gmra.mxu0 %v957
        %v1007 = vpop.f32.mrf.mxu0
        %v1008 = vadd.f32 0.0, %v1007
        %1009 = vmatmul.f32.gmra.mxu0 %v959
        %v1010 = vpop.f32.mrf.mxu0
        %v1011 = vadd.f32 0.0, %v1010
        %1012 = vmatmul.f32.gmra.mxu0 %v961
        %v1013 = vpop.f32.mrf.mxu0
        %v1014 = vadd.f32 0.0, %v1013
        %1015 = vmatmul.f32.gmra.mxu0 %v963
        %v1016 = vpop.f32.mrf.mxu0
        %v1017 = vadd.f32 0.0, %v1016
        %1018 = vmatmul.f32.gmra.mxu0 %v965
        %v1019 = vpop.f32.mrf.mxu0
        %v1020 = vadd.f32 0.0, %v1019
        %1021 = vmatmul.f32.gmra.mxu0 %v967
        %v1022 = vpop.f32.mrf.mxu0
        %v1023 = vadd.f32 0.0, %v1022
        %1024 = vmatmul.f32.gmra.mxu0 %v969
        %v1025 = vpop.f32.mrf.mxu0
        %v1026 = vadd.f32 0.0, %v1025
        %1027 = vdwg.mxu0
        %v1028 = vsel %vm275, %v1005, -inf
        %1029 = vmax.xlane.f32.xlu0 %v1028
        %v1030 = vpop.xlane.xlu0 %1029
        %v1031 = vsel %vm275, %v1008, -inf
        %1032 = vmax.xlane.f32.xlu0 %v1031
        %v1033 = vpop.xlane.xlu0 %1032
        %v1034 = vsel %vm275, %v1011, -inf
        %1035 = vmax.xlane.f32.xlu0 %v1034
        %v1036 = vpop.xlane.xlu0 %1035
        %v1037 = vsel %vm275, %v1014, -inf
        %1038 = vmax.xlane.f32.xlu0 %v1037
        %v1039 = vpop.xlane.xlu0 %1038
        %v1040 = vsel %vm275, %v1017, -inf
        %1041 = vmax.xlane.f32.xlu0 %v1040
        %v1042 = vpop.xlane.xlu0 %1041
        %v1043 = vsel %vm275, %v1020, -inf
        %1044 = vmax.xlane.f32.xlu0 %v1043
        %v1045 = vpop.xlane.xlu0 %1044
        %v1046 = vsel %vm275, %v1023, -inf
        %1047 = vmax.xlane.f32.xlu0 %v1046
        %v1048 = vpop.xlane.xlu0 %1047
        %v1049 = vsel %vm275, %v1026, -inf
        %1050 = vmax.xlane.f32.xlu0 %v1049
        %v1051 = vpop.xlane.xlu0 %1050
        %v1052 = vsub.f32 %v1005, %v1030
        %v1053 = vsub.f32 %v1008, %v1033
        %v1054 = vsub.f32 %v1011, %v1036
        %v1055 = vsub.f32 %v1014, %v1039
        %v1056 = vsub.f32 %v1017, %v1042
        %v1057 = vsub.f32 %v1020, %v1045
        %v1058 = vsub.f32 %v1023, %v1048
        %v1059 = vsub.f32 %v1026, %v1051
        %v1060 = vmul.f32 %v1052, 1.442695
        %v1061 = vpow.pop %v1060
        %v1062 = vmul.f32 %v1053, 1.442695
        %v1063 = vpow.pop %v1062
        %v1064 = vmul.f32 %v1054, 1.442695
        %v1065 = vpow.pop %v1064
        %v1066 = vmul.f32 %v1055, 1.442695
        %v1067 = vpow.pop %v1066
        %v1068 = vmul.f32 %v1056, 1.442695
        %v1069 = vpow.pop %v1068
        %v1070 = vmul.f32 %v1057, 1.442695
        %v1071 = vpow.pop %v1070
        %v1072 = vmul.f32 %v1058, 1.442695
        %v1073 = vpow.pop %v1072
        %v1074 = vmul.f32 %v1059, 1.442695
        %v1075 = vpow.pop %v1074
        %v1076 = vsel %vm275, %v1061, 0.0
        %1077 = vadd.xlane.f32.xlu0 %v1076
        %v1078 = vpop.xlane.xlu0 %1077
        %v1079 = vsel %vm275, %v1063, 0.0
        %1080 = vadd.xlane.f32.xlu0 %v1079
        %v1081 = vpop.xlane.xlu0 %1080
        %v1082 = vsel %vm275, %v1065, 0.0
        %1083 = vadd.xlane.f32.xlu0 %v1082
        %v1084 = vpop.xlane.xlu0 %1083
        %v1085 = vsel %vm275, %v1067, 0.0
        %1086 = vadd.xlane.f32.xlu0 %v1085
        %v1087 = vpop.xlane.xlu0 %1086
        %v1088 = vsel %vm275, %v1069, 0.0
        %1089 = vadd.xlane.f32.xlu0 %v1088
        %v1090 = vpop.xlane.xlu0 %1089
        %v1091 = vsel %vm275, %v1071, 0.0
        %1092 = vadd.xlane.f32.xlu0 %v1091
        %v1093 = vpop.xlane.xlu0 %1092
        %v1094 = vsel %vm275, %v1073, 0.0
        %1095 = vadd.xlane.f32.xlu0 %v1094
        %v1096 = vpop.xlane.xlu0 %1095
        %v1097 = vsel %vm275, %v1075, 0.0
        %1098 = vadd.xlane.f32.xlu0 %v1097
        %v1099 = vpop.xlane.xlu0 %1098
        %v1100 = vrcp.pop %v1078
        %v1101 = vrcp.pop %v1081
        %v1102 = vrcp.pop %v1084
        %v1103 = vrcp.pop %v1087
        %v1104 = vrcp.pop %v1090
        %v1105 = vrcp.pop %v1093
        %v1106 = vrcp.pop %v1096
        %v1107 = vrcp.pop %v1099
        %v1108 = vmul.f32 %v1061, %v1100
        %v1109 = vmul.f32 %v1063, %v1101
        %v1110 = vmul.f32 %v1065, %v1102
        %v1111 = vmul.f32 %v1067, %v1103
        %v1112 = vmul.f32 %v1069, %v1104
        %v1113 = vmul.f32 %v1071, %v1105
        %v1114 = vmul.f32 %v1073, %v1106
        %v1115 = vmul.f32 %v1075, %v1107
        %1116 = vrot.lane.b32.xlu0 %v359, 112
        %v1117 = vpop.permute.xlu0 %1116
        %1118 = vrot.lane.b32.xlu0 %v362, 112
        %v1119 = vpop.permute.xlu0 %1118
        %1120 = vrot.lane.b32.xlu0 %v365, 112
        %v1121 = vpop.permute.xlu0 %1120
        %1122 = vrot.lane.b32.xlu0 %v368, 112
        %v1123 = vpop.permute.xlu0 %1122
        %1124 = vrot.lane.b32.xlu0 %v371, 112
        %v1125 = vpop.permute.xlu0 %1124
        %1126 = vrot.lane.b32.xlu0 %v374, 112
        %v1127 = vpop.permute.xlu0 %1126
        %1128 = vrot.lane.b32.xlu0 %v377, 112
        %v1129 = vpop.permute.xlu0 %1128
        %1130 = vrot.lane.b32.xlu0 %v380, 112
        %v1131 = vpop.permute.xlu0 %1130
        %v1141 = vsel %vm275, %v1108, 0
        %v1144 = vsel %vm275, %v1109, 0
        %v1147 = vsel %vm275, %v1110, 0
        %v1150 = vsel %vm275, %v1111, 0
        %v1153 = vsel %vm275, %v1112, 0
        %v1156 = vsel %vm275, %v1113, 0
        %v1159 = vsel %vm275, %v1114, 0
        %v1162 = vsel %vm275, %v1115, 0
        %1164 = vmatpush.msra.mxu0 0.0
        %1165 = vmatpush.msra.mxu0 0.0
        %1166 = vmatpush.msra.mxu0 0.0
        %1167 = vmatpush.msra.mxu0 0.0
        %1168 = vmatpush.msra.mxu0 0.0
        %1169 = vmatpush.msra.mxu0 0.0
        %1170 = vmatpush.msra.mxu0 0.0
        %1171 = vmatpush.msra.mxu0 0.0
        %1172 = vmatpush.msra.mxu0 %v1131
        %1173 = vmatpush.msra.mxu0 %v1129
        %1174 = vmatpush.msra.mxu0 %v1127
        %1175 = vmatpush.msra.mxu0 %v1125
        %1176 = vmatpush.msra.mxu0 %v1123
        %1177 = vmatpush.msra.mxu0 %v1121
        %1178 = vmatpush.msra.mxu0 %v1119
        %1179 = vmatpush.msra.mxu0 %v1117
        %1180 = vmatmul.f32.gmra.mxu0 %v1141
        %v1181 = vpop.f32.mrf.mxu0
        %v1182 = vadd.f32 0.0, %v1181
        %1183 = vmatmul.f32.gmra.mxu0 %v1144
        %v1184 = vpop.f32.mrf.mxu0
        %v1185 = vadd.f32 0.0, %v1184
        %1186 = vmatmul.f32.gmra.mxu0 %v1147
        %v1187 = vpop.f32.mrf.mxu0
        %v1188 = vadd.f32 0.0, %v1187
        %1189 = vmatmul.f32.gmra.mxu0 %v1150
        %v1190 = vpop.f32.mrf.mxu0
        %v1191 = vadd.f32 0.0, %v1190
        %1192 = vmatmul.f32.gmra.mxu0 %v1153
        %v1193 = vpop.f32.mrf.mxu0
        %v1194 = vadd.f32 0.0, %v1193
        %1195 = vmatmul.f32.gmra.mxu0 %v1156
        %v1196 = vpop.f32.mrf.mxu0
        %v1197 = vadd.f32 0.0, %v1196
        %1198 = vmatmul.f32.gmra.mxu0 %v1159
        %v1199 = vpop.f32.mrf.mxu0
        %v1200 = vadd.f32 0.0, %v1199
        %1201 = vmatmul.f32.gmra.mxu0 %v1162
        %v1202 = vpop.f32.mrf.mxu0
        %v1203 = vadd.f32 0.0, %v1202
        %1204 = vdwg.mxu0
        %1205 = vrot.lane.b32.xlu0 %v318, 104
        %v1206 = vpop.permute.xlu0 %1205
        %1207 = vrot.lane.b32.xlu0 %v321, 104
        %v1208 = vpop.permute.xlu0 %1207
        %1209 = vrot.lane.b32.xlu0 %v324, 104
        %v1210 = vpop.permute.xlu0 %1209
        %1211 = vrot.lane.b32.xlu0 %v327, 104
        %v1212 = vpop.permute.xlu0 %1211
        %1213 = vrot.lane.b32.xlu0 %v330, 104
        %v1214 = vpop.permute.xlu0 %1213
        %1215 = vrot.lane.b32.xlu0 %v333, 104
        %v1216 = vpop.permute.xlu0 %1215
        %1217 = vrot.lane.b32.xlu0 %v336, 104
        %v1218 = vpop.permute.xlu0 %1217
        %1219 = vrot.lane.b32.xlu0 %v339, 104
        %v1220 = vpop.permute.xlu0 %1219
        %1221 = vrot.lane.b32.xlu0 %v318, 40
        %v1222 = vpop.permute.xlu0 %1221
        %1223 = vrot.lane.b32.xlu0 %v321, 40
        %v1224 = vpop.permute.xlu0 %1223
        %1225 = vrot.lane.b32.xlu0 %v324, 40
        %v1226 = vpop.permute.xlu0 %1225
        %1227 = vrot.lane.b32.xlu0 %v327, 40
        %v1228 = vpop.permute.xlu0 %1227
        %1229 = vrot.lane.b32.xlu0 %v330, 40
        %v1230 = vpop.permute.xlu0 %1229
        %1231 = vrot.lane.b32.xlu0 %v333, 40
        %v1232 = vpop.permute.xlu0 %1231
        %1233 = vrot.lane.b32.xlu0 %v336, 40
        %v1234 = vpop.permute.xlu0 %1233
        %1235 = vrot.lane.b32.xlu0 %v339, 40
        %v1236 = vpop.permute.xlu0 %1235
        %v1237 = vsel %vm406, %v1206, 0
        %v1239 = vsel %vm406, %v1208, 0
        %v1241 = vsel %vm406, %v1210, 0
        %v1243 = vsel %vm406, %v1212, 0
        %v1245 = vsel %vm406, %v1214, 0
        %v1247 = vsel %vm406, %v1216, 0
        %v1249 = vsel %vm406, %v1218, 0
        %v1251 = vsel %vm406, %v1220, 0
        %v1253 = vsel %vm406, %v1222, 0
        %v1255 = vsel %vm406, %v1224, 0
        %v1257 = vsel %vm406, %v1226, 0
        %v1259 = vsel %vm406, %v1228, 0
        %v1261 = vsel %vm406, %v1230, 0
        %v1263 = vsel %vm406, %v1232, 0
        %v1265 = vsel %vm406, %v1234, 0
        %v1267 = vsel %vm406, %v1236, 0
        %1269 = vmatpush.xpose.msra.mxu0 0.0
        %1270 = vmatpush.xpose.msra.mxu0 0.0
        %1271 = vmatpush.xpose.msra.mxu0 0.0
        %1272 = vmatpush.xpose.msra.mxu0 0.0
        %1273 = vmatpush.xpose.msra.mxu0 0.0
        %1274 = vmatpush.xpose.msra.mxu0 0.0
        %1275 = vmatpush.xpose.msra.mxu0 0.0
        %1276 = vmatpush.xpose.msra.mxu0 0.0
        %1277 = vmatpush.xpose.msra.mxu0 %v1267
        %1278 = vmatpush.xpose.msra.mxu0 %v1265
        %1279 = vmatpush.xpose.msra.mxu0 %v1263
        %1280 = vmatpush.xpose.msra.mxu0 %v1261
        %1281 = vmatpush.xpose.msra.mxu0 %v1259
        %1282 = vmatpush.xpose.msra.mxu0 %v1257
        %1283 = vmatpush.xpose.msra.mxu0 %v1255
        %1284 = vmatpush.xpose.msra.mxu0 %v1253
        %1285 = vmatmul.f32.gmra.mxu0 %v1237
        %v1286 = vpop.f32.mrf.mxu0
        %v1287 = vadd.f32 0.0, %v1286
        %1288 = vmatmul.f32.gmra.mxu0 %v1239
        %v1289 = vpop.f32.mrf.mxu0
        %v1290 = vadd.f32 0.0, %v1289
        %1291 = vmatmul.f32.gmra.mxu0 %v1241
        %v1292 = vpop.f32.mrf.mxu0
        %v1293 = vadd.f32 0.0, %v1292
        %1294 = vmatmul.f32.gmra.mxu0 %v1243
        %v1295 = vpop.f32.mrf.mxu0
        %v1296 = vadd.f32 0.0, %v1295
        %1297 = vmatmul.f32.gmra.mxu0 %v1245
        %v1298 = vpop.f32.mrf.mxu0
        %v1299 = vadd.f32 0.0, %v1298
        %1300 = vmatmul.f32.gmra.mxu0 %v1247
        %v1301 = vpop.f32.mrf.mxu0
        %v1302 = vadd.f32 0.0, %v1301
        %1303 = vmatmul.f32.gmra.mxu0 %v1249
        %v1304 = vpop.f32.mrf.mxu0
        %v1305 = vadd.f32 0.0, %v1304
        %1306 = vmatmul.f32.gmra.mxu0 %v1251
        %v1307 = vpop.f32.mrf.mxu0
        %v1308 = vadd.f32 0.0, %v1307
        %1309 = vdwg.mxu0
        %v1310 = vsel %vm275, %v1287, -inf
        %1311 = vmax.xlane.f32.xlu0 %v1310
        %v1312 = vpop.xlane.xlu0 %1311
        %v1313 = vsel %vm275, %v1290, -inf
        %1314 = vmax.xlane.f32.xlu0 %v1313
        %v1315 = vpop.xlane.xlu0 %1314
        %v1316 = vsel %vm275, %v1293, -inf
        %1317 = vmax.xlane.f32.xlu0 %v1316
        %v1318 = vpop.xlane.xlu0 %1317
        %v1319 = vsel %vm275, %v1296, -inf
        %1320 = vmax.xlane.f32.xlu0 %v1319
        %v1321 = vpop.xlane.xlu0 %1320
        %v1322 = vsel %vm275, %v1299, -inf
        %1323 = vmax.xlane.f32.xlu0 %v1322
        %v1324 = vpop.xlane.xlu0 %1323
        %v1325 = vsel %vm275, %v1302, -inf
        %1326 = vmax.xlane.f32.xlu0 %v1325
        %v1327 = vpop.xlane.xlu0 %1326
        %v1328 = vsel %vm275, %v1305, -inf
        %1329 = vmax.xlane.f32.xlu0 %v1328
        %v1330 = vpop.xlane.xlu0 %1329
        %v1331 = vsel %vm275, %v1308, -inf
        %1332 = vmax.xlane.f32.xlu0 %v1331
        %v1333 = vpop.xlane.xlu0 %1332
        %v1334 = vsub.f32 %v1287, %v1312
        %v1335 = vsub.f32 %v1290, %v1315
        %v1336 = vsub.f32 %v1293, %v1318
        %v1337 = vsub.f32 %v1296, %v1321
        %v1338 = vsub.f32 %v1299, %v1324
        %v1339 = vsub.f32 %v1302, %v1327
        %v1340 = vsub.f32 %v1305, %v1330
        %v1341 = vsub.f32 %v1308, %v1333
        %v1342 = vmul.f32 %v1334, 1.442695
        %v1343 = vpow.pop %v1342
        %v1344 = vmul.f32 %v1335, 1.442695
        %v1345 = vpow.pop %v1344
        %v1346 = vmul.f32 %v1336, 1.442695
        %v1347 = vpow.pop %v1346
        %v1348 = vmul.f32 %v1337, 1.442695
        %v1349 = vpow.pop %v1348
        %v1350 = vmul.f32 %v1338, 1.442695
        %v1351 = vpow.pop %v1350
        %v1352 = vmul.f32 %v1339, 1.442695
        %v1353 = vpow.pop %v1352
        %v1354 = vmul.f32 %v1340, 1.442695
        %v1355 = vpow.pop %v1354
        %v1356 = vmul.f32 %v1341, 1.442695
        %v1357 = vpow.pop %v1356
        %v1358 = vsel %vm275, %v1343, 0.0
        %1359 = vadd.xlane.f32.xlu0 %v1358
        %v1360 = vpop.xlane.xlu0 %1359
        %v1361 = vsel %vm275, %v1345, 0.0
        %1362 = vadd.xlane.f32.xlu0 %v1361
        %v1363 = vpop.xlane.xlu0 %1362
        %v1364 = vsel %vm275, %v1347, 0.0
        %1365 = vadd.xlane.f32.xlu0 %v1364
        %v1366 = vpop.xlane.xlu0 %1365
        %v1367 = vsel %vm275, %v1349, 0.0
        %1368 = vadd.xlane.f32.xlu0 %v1367
        %v1369 = vpop.xlane.xlu0 %1368
        %v1370 = vsel %vm275, %v1351, 0.0
        %1371 = vadd.xlane.f32.xlu0 %v1370
        %v1372 = vpop.xlane.xlu0 %1371
        %v1373 = vsel %vm275, %v1353, 0.0
        %1374 = vadd.xlane.f32.xlu0 %v1373
        %v1375 = vpop.xlane.xlu0 %1374
        %v1376 = vsel %vm275, %v1355, 0.0
        %1377 = vadd.xlane.f32.xlu0 %v1376
        %v1378 = vpop.xlane.xlu0 %1377
        %v1379 = vsel %vm275, %v1357, 0.0
        %1380 = vadd.xlane.f32.xlu0 %v1379
        %v1381 = vpop.xlane.xlu0 %1380
        %v1382 = vrcp.pop %v1360
        %v1383 = vrcp.pop %v1363
        %v1384 = vrcp.pop %v1366
        %v1385 = vrcp.pop %v1369
        %v1386 = vrcp.pop %v1372
        %v1387 = vrcp.pop %v1375
        %v1388 = vrcp.pop %v1378
        %v1389 = vrcp.pop %v1381
        %v1390 = vmul.f32 %v1343, %v1382
        %v1391 = vmul.f32 %v1345, %v1383
        %v1392 = vmul.f32 %v1347, %v1384
        %v1393 = vmul.f32 %v1349, %v1385
        %v1394 = vmul.f32 %v1351, %v1386
        %v1395 = vmul.f32 %v1353, %v1387
        %v1396 = vmul.f32 %v1355, %v1388
        %v1397 = vmul.f32 %v1357, %v1389
        %1398 = vrot.lane.b32.xlu0 %v359, 104
        %v1399 = vpop.permute.xlu0 %1398
        %1400 = vrot.lane.b32.xlu0 %v362, 104
        %v1401 = vpop.permute.xlu0 %1400
        %1402 = vrot.lane.b32.xlu0 %v365, 104
        %v1403 = vpop.permute.xlu0 %1402
        %1404 = vrot.lane.b32.xlu0 %v368, 104
        %v1405 = vpop.permute.xlu0 %1404
        %1406 = vrot.lane.b32.xlu0 %v371, 104
        %v1407 = vpop.permute.xlu0 %1406
        %1408 = vrot.lane.b32.xlu0 %v374, 104
        %v1409 = vpop.permute.xlu0 %1408
        %1410 = vrot.lane.b32.xlu0 %v377, 104
        %v1411 = vpop.permute.xlu0 %1410
        %1412 = vrot.lane.b32.xlu0 %v380, 104
        %v1413 = vpop.permute.xlu0 %1412
        %v1423 = vsel %vm275, %v1390, 0
        %v1426 = vsel %vm275, %v1391, 0
        %v1429 = vsel %vm275, %v1392, 0
        %v1432 = vsel %vm275, %v1393, 0
        %v1435 = vsel %vm275, %v1394, 0
        %v1438 = vsel %vm275, %v1395, 0
        %v1441 = vsel %vm275, %v1396, 0
        %v1444 = vsel %vm275, %v1397, 0
        %1446 = vmatpush.msra.mxu0 0.0
        %1447 = vmatpush.msra.mxu0 0.0
        %1448 = vmatpush.msra.mxu0 0.0
        %1449 = vmatpush.msra.mxu0 0.0
        %1450 = vmatpush.msra.mxu0 0.0
        %1451 = vmatpush.msra.mxu0 0.0
        %1452 = vmatpush.msra.mxu0 0.0
        %1453 = vmatpush.msra.mxu0 0.0
        %1454 = vmatpush.msra.mxu0 %v1413
        %1455 = vmatpush.msra.mxu0 %v1411
        %1456 = vmatpush.msra.mxu0 %v1409
        %1457 = vmatpush.msra.mxu0 %v1407
        %1458 = vmatpush.msra.mxu0 %v1405
        %1459 = vmatpush.msra.mxu0 %v1403
        %1460 = vmatpush.msra.mxu0 %v1401
        %1461 = vmatpush.msra.mxu0 %v1399
        %1462 = vmatmul.f32.gmra.mxu0 %v1423
        %v1463 = vpop.f32.mrf.mxu0
        %v1464 = vadd.f32 0.0, %v1463
        %1465 = vmatmul.f32.gmra.mxu0 %v1426
        %v1466 = vpop.f32.mrf.mxu0
        %v1467 = vadd.f32 0.0, %v1466
        %1468 = vmatmul.f32.gmra.mxu0 %v1429
        %v1469 = vpop.f32.mrf.mxu0
        %v1470 = vadd.f32 0.0, %v1469
        %1471 = vmatmul.f32.gmra.mxu0 %v1432
        %v1472 = vpop.f32.mrf.mxu0
        %v1473 = vadd.f32 0.0, %v1472
        %1474 = vmatmul.f32.gmra.mxu0 %v1435
        %v1475 = vpop.f32.mrf.mxu0
        %v1476 = vadd.f32 0.0, %v1475
        %1477 = vmatmul.f32.gmra.mxu0 %v1438
        %v1478 = vpop.f32.mrf.mxu0
        %v1479 = vadd.f32 0.0, %v1478
        %1480 = vmatmul.f32.gmra.mxu0 %v1441
        %v1481 = vpop.f32.mrf.mxu0
        %v1482 = vadd.f32 0.0, %v1481
        %1483 = vmatmul.f32.gmra.mxu0 %v1444
        %v1484 = vpop.f32.mrf.mxu0
        %v1485 = vadd.f32 0.0, %v1484
        %1486 = vdwg.mxu0
        %1487 = vrot.lane.b32.xlu0 %v318, 96
        %v1488 = vpop.permute.xlu0 %1487
        %1489 = vrot.lane.b32.xlu0 %v321, 96
        %v1490 = vpop.permute.xlu0 %1489
        %1491 = vrot.lane.b32.xlu0 %v324, 96
        %v1492 = vpop.permute.xlu0 %1491
        %1493 = vrot.lane.b32.xlu0 %v327, 96
        %v1494 = vpop.permute.xlu0 %1493
        %1495 = vrot.lane.b32.xlu0 %v330, 96
        %v1496 = vpop.permute.xlu0 %1495
        %1497 = vrot.lane.b32.xlu0 %v333, 96
        %v1498 = vpop.permute.xlu0 %1497
        %1499 = vrot.lane.b32.xlu0 %v336, 96
        %v1500 = vpop.permute.xlu0 %1499
        %1501 = vrot.lane.b32.xlu0 %v339, 96
        %v1502 = vpop.permute.xlu0 %1501
        %1503 = vrot.lane.b32.xlu0 %v318, 32
        %v1504 = vpop.permute.xlu0 %1503
        %1505 = vrot.lane.b32.xlu0 %v321, 32
        %v1506 = vpop.permute.xlu0 %1505
        %1507 = vrot.lane.b32.xlu0 %v324, 32
        %v1508 = vpop.permute.xlu0 %1507
        %1509 = vrot.lane.b32.xlu0 %v327, 32
        %v1510 = vpop.permute.xlu0 %1509
        %1511 = vrot.lane.b32.xlu0 %v330, 32
        %v1512 = vpop.permute.xlu0 %1511
        %1513 = vrot.lane.b32.xlu0 %v333, 32
        %v1514 = vpop.permute.xlu0 %1513
        %1515 = vrot.lane.b32.xlu0 %v336, 32
        %v1516 = vpop.permute.xlu0 %1515
        %1517 = vrot.lane.b32.xlu0 %v339, 32
        %v1518 = vpop.permute.xlu0 %1517
        %v1519 = vsel %vm406, %v1488, 0
        %v1521 = vsel %vm406, %v1490, 0
        %v1523 = vsel %vm406, %v1492, 0
        %v1525 = vsel %vm406, %v1494, 0
        %v1527 = vsel %vm406, %v1496, 0
        %v1529 = vsel %vm406, %v1498, 0
        %v1531 = vsel %vm406, %v1500, 0
        %v1533 = vsel %vm406, %v1502, 0
        %v1535 = vsel %vm406, %v1504, 0
        %v1537 = vsel %vm406, %v1506, 0
        %v1539 = vsel %vm406, %v1508, 0
        %v1541 = vsel %vm406, %v1510, 0
        %v1543 = vsel %vm406, %v1512, 0
        %v1545 = vsel %vm406, %v1514, 0
        %v1547 = vsel %vm406, %v1516, 0
        %v1549 = vsel %vm406, %v1518, 0
        %1551 = vmatpush.xpose.msra.mxu0 0.0
        %1552 = vmatpush.xpose.msra.mxu0 0.0
        %1553 = vmatpush.xpose.msra.mxu0 0.0
        %1554 = vmatpush.xpose.msra.mxu0 0.0
        %1555 = vmatpush.xpose.msra.mxu0 0.0
        %1556 = vmatpush.xpose.msra.mxu0 0.0
        %1557 = vmatpush.xpose.msra.mxu0 0.0
        %1558 = vmatpush.xpose.msra.mxu0 0.0
        %1559 = vmatpush.xpose.msra.mxu0 %v1549
        %1560 = vmatpush.xpose.msra.mxu0 %v1547
        %1561 = vmatpush.xpose.msra.mxu0 %v1545
        %1562 = vmatpush.xpose.msra.mxu0 %v1543
        %1563 = vmatpush.xpose.msra.mxu0 %v1541
        %1564 = vmatpush.xpose.msra.mxu0 %v1539
        %1565 = vmatpush.xpose.msra.mxu0 %v1537
        %1566 = vmatpush.xpose.msra.mxu0 %v1535
        %1567 = vmatmul.f32.gmra.mxu0 %v1519
        %v1568 = vpop.f32.mrf.mxu0
        %v1569 = vadd.f32 0.0, %v1568
        %1570 = vmatmul.f32.gmra.mxu0 %v1521
        %v1571 = vpop.f32.mrf.mxu0
        %v1572 = vadd.f32 0.0, %v1571
        %1573 = vmatmul.f32.gmra.mxu0 %v1523
        %v1574 = vpop.f32.mrf.mxu0
        %v1575 = vadd.f32 0.0, %v1574
        %1576 = vmatmul.f32.gmra.mxu0 %v1525
        %v1577 = vpop.f32.mrf.mxu0
        %v1578 = vadd.f32 0.0, %v1577
        %1579 = vmatmul.f32.gmra.mxu0 %v1527
        %v1580 = vpop.f32.mrf.mxu0
        %v1581 = vadd.f32 0.0, %v1580
        %1582 = vmatmul.f32.gmra.mxu0 %v1529
        %v1583 = vpop.f32.mrf.mxu0
        %v1584 = vadd.f32 0.0, %v1583
        %1585 = vmatmul.f32.gmra.mxu0 %v1531
        %v1586 = vpop.f32.mrf.mxu0
        %v1587 = vadd.f32 0.0, %v1586
        %1588 = vmatmul.f32.gmra.mxu0 %v1533
        %v1589 = vpop.f32.mrf.mxu0
        %v1590 = vadd.f32 0.0, %v1589
        %1591 = vdwg.mxu0
        %v1592 = vsel %vm275, %v1569, -inf
        %1593 = vmax.xlane.f32.xlu0 %v1592
        %v1594 = vpop.xlane.xlu0 %1593
        %v1595 = vsel %vm275, %v1572, -inf
        %1596 = vmax.xlane.f32.xlu0 %v1595
        %v1597 = vpop.xlane.xlu0 %1596
        %v1598 = vsel %vm275, %v1575, -inf
        %1599 = vmax.xlane.f32.xlu0 %v1598
        %v1600 = vpop.xlane.xlu0 %1599
        %v1601 = vsel %vm275, %v1578, -inf
        %1602 = vmax.xlane.f32.xlu0 %v1601
        %v1603 = vpop.xlane.xlu0 %1602
        %v1604 = vsel %vm275, %v1581, -inf
        %1605 = vmax.xlane.f32.xlu0 %v1604
        %v1606 = vpop.xlane.xlu0 %1605
        %v1607 = vsel %vm275, %v1584, -inf
        %1608 = vmax.xlane.f32.xlu0 %v1607
        %v1609 = vpop.xlane.xlu0 %1608
        %v1610 = vsel %vm275, %v1587, -inf
        %1611 = vmax.xlane.f32.xlu0 %v1610
        %v1612 = vpop.xlane.xlu0 %1611
        %v1613 = vsel %vm275, %v1590, -inf
        %1614 = vmax.xlane.f32.xlu0 %v1613
        %v1615 = vpop.xlane.xlu0 %1614
        %v1616 = vsub.f32 %v1569, %v1594
        %v1617 = vsub.f32 %v1572, %v1597
        %v1618 = vsub.f32 %v1575, %v1600
        %v1619 = vsub.f32 %v1578, %v1603
        %v1620 = vsub.f32 %v1581, %v1606
        %v1621 = vsub.f32 %v1584, %v1609
        %v1622 = vsub.f32 %v1587, %v1612
        %v1623 = vsub.f32 %v1590, %v1615
        %v1624 = vmul.f32 %v1616, 1.442695
        %v1625 = vpow.pop %v1624
        %v1626 = vmul.f32 %v1617, 1.442695
        %v1627 = vpow.pop %v1626
        %v1628 = vmul.f32 %v1618, 1.442695
        %v1629 = vpow.pop %v1628
        %v1630 = vmul.f32 %v1619, 1.442695
        %v1631 = vpow.pop %v1630
        %v1632 = vmul.f32 %v1620, 1.442695
        %v1633 = vpow.pop %v1632
        %v1634 = vmul.f32 %v1621, 1.442695
        %v1635 = vpow.pop %v1634
        %v1636 = vmul.f32 %v1622, 1.442695
        %v1637 = vpow.pop %v1636
        %v1638 = vmul.f32 %v1623, 1.442695
        %v1639 = vpow.pop %v1638
        %v1640 = vsel %vm275, %v1625, 0.0
        %1641 = vadd.xlane.f32.xlu0 %v1640
        %v1642 = vpop.xlane.xlu0 %1641
        %v1643 = vsel %vm275, %v1627, 0.0
        %1644 = vadd.xlane.f32.xlu0 %v1643
        %v1645 = vpop.xlane.xlu0 %1644
        %v1646 = vsel %vm275, %v1629, 0.0
        %1647 = vadd.xlane.f32.xlu0 %v1646
        %v1648 = vpop.xlane.xlu0 %1647
        %v1649 = vsel %vm275, %v1631, 0.0
        %1650 = vadd.xlane.f32.xlu0 %v1649
        %v1651 = vpop.xlane.xlu0 %1650
        %v1652 = vsel %vm275, %v1633, 0.0
        %1653 = vadd.xlane.f32.xlu0 %v1652
        %v1654 = vpop.xlane.xlu0 %1653
        %v1655 = vsel %vm275, %v1635, 0.0
        %1656 = vadd.xlane.f32.xlu0 %v1655
        %v1657 = vpop.xlane.xlu0 %1656
        %v1658 = vsel %vm275, %v1637, 0.0
        %1659 = vadd.xlane.f32.xlu0 %v1658
        %v1660 = vpop.xlane.xlu0 %1659
        %v1661 = vsel %vm275, %v1639, 0.0
        %1662 = vadd.xlane.f32.xlu0 %v1661
        %v1663 = vpop.xlane.xlu0 %1662
        %v1664 = vrcp.pop %v1642
        %v1665 = vrcp.pop %v1645
        %v1666 = vrcp.pop %v1648
        %v1667 = vrcp.pop %v1651
        %v1668 = vrcp.pop %v1654
        %v1669 = vrcp.pop %v1657
        %v1670 = vrcp.pop %v1660
        %v1671 = vrcp.pop %v1663
        %v1672 = vmul.f32 %v1625, %v1664
        %v1673 = vmul.f32 %v1627, %v1665
        %v1674 = vmul.f32 %v1629, %v1666
        %v1675 = vmul.f32 %v1631, %v1667
        %v1676 = vmul.f32 %v1633, %v1668
        %v1677 = vmul.f32 %v1635, %v1669
        %v1678 = vmul.f32 %v1637, %v1670
        %v1679 = vmul.f32 %v1639, %v1671
        %1680 = vrot.lane.b32.xlu0 %v359, 96
        %v1681 = vpop.permute.xlu0 %1680
        %1682 = vrot.lane.b32.xlu0 %v362, 96
        %v1683 = vpop.permute.xlu0 %1682
        %1684 = vrot.lane.b32.xlu0 %v365, 96
        %v1685 = vpop.permute.xlu0 %1684
        %1686 = vrot.lane.b32.xlu0 %v368, 96
        %v1687 = vpop.permute.xlu0 %1686
        %1688 = vrot.lane.b32.xlu0 %v371, 96
        %v1689 = vpop.permute.xlu0 %1688
        %1690 = vrot.lane.b32.xlu0 %v374, 96
        %v1691 = vpop.permute.xlu0 %1690
        %1692 = vrot.lane.b32.xlu0 %v377, 96
        %v1693 = vpop.permute.xlu0 %1692
        %1694 = vrot.lane.b32.xlu0 %v380, 96
        %v1695 = vpop.permute.xlu0 %1694
        %v1705 = vsel %vm275, %v1672, 0
        %v1708 = vsel %vm275, %v1673, 0
        %v1711 = vsel %vm275, %v1674, 0
        %v1714 = vsel %vm275, %v1675, 0
        %v1717 = vsel %vm275, %v1676, 0
        %v1720 = vsel %vm275, %v1677, 0
        %v1723 = vsel %vm275, %v1678, 0
        %v1726 = vsel %vm275, %v1679, 0
        %1728 = vmatpush.msra.mxu0 0.0
        %1729 = vmatpush.msra.mxu0 0.0
        %1730 = vmatpush.msra.mxu0 0.0
        %1731 = vmatpush.msra.mxu0 0.0
        %1732 = vmatpush.msra.mxu0 0.0
        %1733 = vmatpush.msra.mxu0 0.0
        %1734 = vmatpush.msra.mxu0 0.0
        %1735 = vmatpush.msra.mxu0 0.0
        %1736 = vmatpush.msra.mxu0 %v1695
        %1737 = vmatpush.msra.mxu0 %v1693
        %1738 = vmatpush.msra.mxu0 %v1691
        %1739 = vmatpush.msra.mxu0 %v1689
        %1740 = vmatpush.msra.mxu0 %v1687
        %1741 = vmatpush.msra.mxu0 %v1685
        %1742 = vmatpush.msra.mxu0 %v1683
        %1743 = vmatpush.msra.mxu0 %v1681
        %1744 = vmatmul.f32.gmra.mxu0 %v1705
        %v1745 = vpop.f32.mrf.mxu0
        %v1746 = vadd.f32 0.0, %v1745
        %1747 = vmatmul.f32.gmra.mxu0 %v1708
        %v1748 = vpop.f32.mrf.mxu0
        %v1749 = vadd.f32 0.0, %v1748
        %1750 = vmatmul.f32.gmra.mxu0 %v1711
        %v1751 = vpop.f32.mrf.mxu0
        %v1752 = vadd.f32 0.0, %v1751
        %1753 = vmatmul.f32.gmra.mxu0 %v1714
        %v1754 = vpop.f32.mrf.mxu0
        %v1755 = vadd.f32 0.0, %v1754
        %1756 = vmatmul.f32.gmra.mxu0 %v1717
        %v1757 = vpop.f32.mrf.mxu0
        %v1758 = vadd.f32 0.0, %v1757
        %1759 = vmatmul.f32.gmra.mxu0 %v1720
        %v1760 = vpop.f32.mrf.mxu0
        %v1761 = vadd.f32 0.0, %v1760
        %1762 = vmatmul.f32.gmra.mxu0 %v1723
        %v1763 = vpop.f32.mrf.mxu0
        %v1764 = vadd.f32 0.0, %v1763
        %1765 = vmatmul.f32.gmra.mxu0 %v1726
        %v1766 = vpop.f32.mrf.mxu0
        %v1767 = vadd.f32 0.0, %v1766
        %1768 = vdwg.mxu0
        %1769 = vrot.lane.b32.xlu0 %v318, 88
        %v1770 = vpop.permute.xlu0 %1769
        %1771 = vrot.lane.b32.xlu0 %v321, 88
        %v1772 = vpop.permute.xlu0 %1771
        %1773 = vrot.lane.b32.xlu0 %v324, 88
        %v1774 = vpop.permute.xlu0 %1773
        %1775 = vrot.lane.b32.xlu0 %v327, 88
        %v1776 = vpop.permute.xlu0 %1775
        %1777 = vrot.lane.b32.xlu0 %v330, 88
        %v1778 = vpop.permute.xlu0 %1777
        %1779 = vrot.lane.b32.xlu0 %v333, 88
        %v1780 = vpop.permute.xlu0 %1779
        %1781 = vrot.lane.b32.xlu0 %v336, 88
        %v1782 = vpop.permute.xlu0 %1781
        %1783 = vrot.lane.b32.xlu0 %v339, 88
        %v1784 = vpop.permute.xlu0 %1783
        %1785 = vrot.lane.b32.xlu0 %v318, 24
        %v1786 = vpop.permute.xlu0 %1785
        %1787 = vrot.lane.b32.xlu0 %v321, 24
        %v1788 = vpop.permute.xlu0 %1787
        %1789 = vrot.lane.b32.xlu0 %v324, 24
        %v1790 = vpop.permute.xlu0 %1789
        %1791 = vrot.lane.b32.xlu0 %v327, 24
        %v1792 = vpop.permute.xlu0 %1791
        %1793 = vrot.lane.b32.xlu0 %v330, 24
        %v1794 = vpop.permute.xlu0 %1793
        %1795 = vrot.lane.b32.xlu0 %v333, 24
        %v1796 = vpop.permute.xlu0 %1795
        %1797 = vrot.lane.b32.xlu0 %v336, 24
        %v1798 = vpop.permute.xlu0 %1797
        %1799 = vrot.lane.b32.xlu0 %v339, 24
        %v1800 = vpop.permute.xlu0 %1799
        %v1801 = vsel %vm406, %v1770, 0
        %v1803 = vsel %vm406, %v1772, 0
        %v1805 = vsel %vm406, %v1774, 0
        %v1807 = vsel %vm406, %v1776, 0
        %v1809 = vsel %vm406, %v1778, 0
        %v1811 = vsel %vm406, %v1780, 0
        %v1813 = vsel %vm406, %v1782, 0
        %v1815 = vsel %vm406, %v1784, 0
        %v1817 = vsel %vm406, %v1786, 0
        %v1819 = vsel %vm406, %v1788, 0
        %v1821 = vsel %vm406, %v1790, 0
        %v1823 = vsel %vm406, %v1792, 0
        %v1825 = vsel %vm406, %v1794, 0
        %v1827 = vsel %vm406, %v1796, 0
        %v1829 = vsel %vm406, %v1798, 0
        %v1831 = vsel %vm406, %v1800, 0
        %1833 = vmatpush.xpose.msra.mxu0 0.0
        %1834 = vmatpush.xpose.msra.mxu0 0.0
        %1835 = vmatpush.xpose.msra.mxu0 0.0
        %1836 = vmatpush.xpose.msra.mxu0 0.0
        %1837 = vmatpush.xpose.msra.mxu0 0.0
        %1838 = vmatpush.xpose.msra.mxu0 0.0
        %1839 = vmatpush.xpose.msra.mxu0 0.0
        %1840 = vmatpush.xpose.msra.mxu0 0.0
        %1841 = vmatpush.xpose.msra.mxu0 %v1831
        %1842 = vmatpush.xpose.msra.mxu0 %v1829
        %1843 = vmatpush.xpose.msra.mxu0 %v1827
        %1844 = vmatpush.xpose.msra.mxu0 %v1825
        %1845 = vmatpush.xpose.msra.mxu0 %v1823
        %1846 = vmatpush.xpose.msra.mxu0 %v1821
        %1847 = vmatpush.xpose.msra.mxu0 %v1819
        %1848 = vmatpush.xpose.msra.mxu0 %v1817
        %1849 = vmatmul.f32.gmra.mxu0 %v1801
        %v1850 = vpop.f32.mrf.mxu0
        %v1851 = vadd.f32 0.0, %v1850
        %1852 = vmatmul.f32.gmra.mxu0 %v1803
        %v1853 = vpop.f32.mrf.mxu0
        %v1854 = vadd.f32 0.0, %v1853
        %1855 = vmatmul.f32.gmra.mxu0 %v1805
        %v1856 = vpop.f32.mrf.mxu0
        %v1857 = vadd.f32 0.0, %v1856
        %1858 = vmatmul.f32.gmra.mxu0 %v1807
        %v1859 = vpop.f32.mrf.mxu0
        %v1860 = vadd.f32 0.0, %v1859
        %1861 = vmatmul.f32.gmra.mxu0 %v1809
        %v1862 = vpop.f32.mrf.mxu0
        %v1863 = vadd.f32 0.0, %v1862
        %1864 = vmatmul.f32.gmra.mxu0 %v1811
        %v1865 = vpop.f32.mrf.mxu0
        %v1866 = vadd.f32 0.0, %v1865
        %1867 = vmatmul.f32.gmra.mxu0 %v1813
        %v1868 = vpop.f32.mrf.mxu0
        %v1869 = vadd.f32 0.0, %v1868
        %1870 = vmatmul.f32.gmra.mxu0 %v1815
        %v1871 = vpop.f32.mrf.mxu0
        %v1872 = vadd.f32 0.0, %v1871
        %1873 = vdwg.mxu0
        %v1874 = vsel %vm275, %v1851, -inf
        %1875 = vmax.xlane.f32.xlu0 %v1874
        %v1876 = vpop.xlane.xlu0 %1875
        %v1877 = vsel %vm275, %v1854, -inf
        %1878 = vmax.xlane.f32.xlu0 %v1877
        %v1879 = vpop.xlane.xlu0 %1878
        %v1880 = vsel %vm275, %v1857, -inf
        %1881 = vmax.xlane.f32.xlu0 %v1880
        %v1882 = vpop.xlane.xlu0 %1881
        %v1883 = vsel %vm275, %v1860, -inf
        %1884 = vmax.xlane.f32.xlu0 %v1883
        %v1885 = vpop.xlane.xlu0 %1884
        %v1886 = vsel %vm275, %v1863, -inf
        %1887 = vmax.xlane.f32.xlu0 %v1886
        %v1888 = vpop.xlane.xlu0 %1887
        %v1889 = vsel %vm275, %v1866, -inf
        %1890 = vmax.xlane.f32.xlu0 %v1889
        %v1891 = vpop.xlane.xlu0 %1890
        %v1892 = vsel %vm275, %v1869, -inf
        %1893 = vmax.xlane.f32.xlu0 %v1892
        %v1894 = vpop.xlane.xlu0 %1893
        %v1895 = vsel %vm275, %v1872, -inf
        %1896 = vmax.xlane.f32.xlu0 %v1895
        %v1897 = vpop.xlane.xlu0 %1896
        %v1898 = vsub.f32 %v1851, %v1876
        %v1899 = vsub.f32 %v1854, %v1879
        %v1900 = vsub.f32 %v1857, %v1882
        %v1901 = vsub.f32 %v1860, %v1885
        %v1902 = vsub.f32 %v1863, %v1888
        %v1903 = vsub.f32 %v1866, %v1891
        %v1904 = vsub.f32 %v1869, %v1894
        %v1905 = vsub.f32 %v1872, %v1897
        %v1906 = vmul.f32 %v1898, 1.442695
        %v1907 = vpow.pop %v1906
        %v1908 = vmul.f32 %v1899, 1.442695
        %v1909 = vpow.pop %v1908
        %v1910 = vmul.f32 %v1900, 1.442695
        %v1911 = vpow.pop %v1910
        %v1912 = vmul.f32 %v1901, 1.442695
        %v1913 = vpow.pop %v1912
        %v1914 = vmul.f32 %v1902, 1.442695
        %v1915 = vpow.pop %v1914
        %v1916 = vmul.f32 %v1903, 1.442695
        %v1917 = vpow.pop %v1916
        %v1918 = vmul.f32 %v1904, 1.442695
        %v1919 = vpow.pop %v1918
        %v1920 = vmul.f32 %v1905, 1.442695
        %v1921 = vpow.pop %v1920
        %v1922 = vsel %vm275, %v1907, 0.0
        %1923 = vadd.xlane.f32.xlu0 %v1922
        %v1924 = vpop.xlane.xlu0 %1923
        %v1925 = vsel %vm275, %v1909, 0.0
        %1926 = vadd.xlane.f32.xlu0 %v1925
        %v1927 = vpop.xlane.xlu0 %1926
        %v1928 = vsel %vm275, %v1911, 0.0
        %1929 = vadd.xlane.f32.xlu0 %v1928
        %v1930 = vpop.xlane.xlu0 %1929
        %v1931 = vsel %vm275, %v1913, 0.0
        %1932 = vadd.xlane.f32.xlu0 %v1931
        %v1933 = vpop.xlane.xlu0 %1932
        %v1934 = vsel %vm275, %v1915, 0.0
        %1935 = vadd.xlane.f32.xlu0 %v1934
        %v1936 = vpop.xlane.xlu0 %1935
        %v1937 = vsel %vm275, %v1917, 0.0
        %1938 = vadd.xlane.f32.xlu0 %v1937
        %v1939 = vpop.xlane.xlu0 %1938
        %v1940 = vsel %vm275, %v1919, 0.0
        %1941 = vadd.xlane.f32.xlu0 %v1940
        %v1942 = vpop.xlane.xlu0 %1941
        %v1943 = vsel %vm275, %v1921, 0.0
        %1944 = vadd.xlane.f32.xlu0 %v1943
        %v1945 = vpop.xlane.xlu0 %1944
        %v1946 = vrcp.pop %v1924
        %v1947 = vrcp.pop %v1927
        %v1948 = vrcp.pop %v1930
        %v1949 = vrcp.pop %v1933
        %v1950 = vrcp.pop %v1936
        %v1951 = vrcp.pop %v1939
        %v1952 = vrcp.pop %v1942
        %v1953 = vrcp.pop %v1945
        %v1954 = vmul.f32 %v1907, %v1946
        %v1955 = vmul.f32 %v1909, %v1947
        %v1956 = vmul.f32 %v1911, %v1948
        %v1957 = vmul.f32 %v1913, %v1949
        %v1958 = vmul.f32 %v1915, %v1950
        %v1959 = vmul.f32 %v1917, %v1951
        %v1960 = vmul.f32 %v1919, %v1952
        %v1961 = vmul.f32 %v1921, %v1953
        %1962 = vrot.lane.b32.xlu0 %v359, 88
        %v1963 = vpop.permute.xlu0 %1962
        %1964 = vrot.lane.b32.xlu0 %v362, 88
        %v1965 = vpop.permute.xlu0 %1964
        %1966 = vrot.lane.b32.xlu0 %v365, 88
        %v1967 = vpop.permute.xlu0 %1966
        %1968 = vrot.lane.b32.xlu0 %v368, 88
        %v1969 = vpop.permute.xlu0 %1968
        %1970 = vrot.lane.b32.xlu0 %v371, 88
        %v1971 = vpop.permute.xlu0 %1970
        %1972 = vrot.lane.b32.xlu0 %v374, 88
        %v1973 = vpop.permute.xlu0 %1972
        %1974 = vrot.lane.b32.xlu0 %v377, 88
        %v1975 = vpop.permute.xlu0 %1974
        %1976 = vrot.lane.b32.xlu0 %v380, 88
        %v1977 = vpop.permute.xlu0 %1976
        %v1987 = vsel %vm275, %v1954, 0
        %v1990 = vsel %vm275, %v1955, 0
        %v1993 = vsel %vm275, %v1956, 0
        %v1996 = vsel %vm275, %v1957, 0
        %v1999 = vsel %vm275, %v1958, 0
        %v2002 = vsel %vm275, %v1959, 0
        %v2005 = vsel %vm275, %v1960, 0
        %v2008 = vsel %vm275, %v1961, 0
        %2010 = vmatpush.msra.mxu0 0.0
        %2011 = vmatpush.msra.mxu0 0.0
        %2012 = vmatpush.msra.mxu0 0.0
        %2013 = vmatpush.msra.mxu0 0.0
        %2014 = vmatpush.msra.mxu0 0.0
        %2015 = vmatpush.msra.mxu0 0.0
        %2016 = vmatpush.msra.mxu0 0.0
        %2017 = vmatpush.msra.mxu0 0.0
        %2018 = vmatpush.msra.mxu0 %v1977
        %2019 = vmatpush.msra.mxu0 %v1975
        %2020 = vmatpush.msra.mxu0 %v1973
        %2021 = vmatpush.msra.mxu0 %v1971
        %2022 = vmatpush.msra.mxu0 %v1969
        %2023 = vmatpush.msra.mxu0 %v1967
        %2024 = vmatpush.msra.mxu0 %v1965
        %2025 = vmatpush.msra.mxu0 %v1963
        %2026 = vmatmul.f32.gmra.mxu0 %v1987
        %v2027 = vpop.f32.mrf.mxu0
        %v2028 = vadd.f32 0.0, %v2027
        %2029 = vmatmul.f32.gmra.mxu0 %v1990
        %v2030 = vpop.f32.mrf.mxu0
        %v2031 = vadd.f32 0.0, %v2030
        %2032 = vmatmul.f32.gmra.mxu0 %v1993
        %v2033 = vpop.f32.mrf.mxu0
        %v2034 = vadd.f32 0.0, %v2033
        %2035 = vmatmul.f32.gmra.mxu0 %v1996
        %v2036 = vpop.f32.mrf.mxu0
        %v2037 = vadd.f32 0.0, %v2036
        %2038 = vmatmul.f32.gmra.mxu0 %v1999
        %v2039 = vpop.f32.mrf.mxu0
        %v2040 = vadd.f32 0.0, %v2039
        %2041 = vmatmul.f32.gmra.mxu0 %v2002
        %v2042 = vpop.f32.mrf.mxu0
        %v2043 = vadd.f32 0.0, %v2042
        %2044 = vmatmul.f32.gmra.mxu0 %v2005
        %v2045 = vpop.f32.mrf.mxu0
        %v2046 = vadd.f32 0.0, %v2045
        %2047 = vmatmul.f32.gmra.mxu0 %v2008
        %v2048 = vpop.f32.mrf.mxu0
        %v2049 = vadd.f32 0.0, %v2048
        %2050 = vdwg.mxu0
        %2051 = vrot.lane.b32.xlu0 %v318, 80
        %v2052 = vpop.permute.xlu0 %2051
        %2053 = vrot.lane.b32.xlu0 %v321, 80
        %v2054 = vpop.permute.xlu0 %2053
        %2055 = vrot.lane.b32.xlu0 %v324, 80
        %v2056 = vpop.permute.xlu0 %2055
        %2057 = vrot.lane.b32.xlu0 %v327, 80
        %v2058 = vpop.permute.xlu0 %2057
        %2059 = vrot.lane.b32.xlu0 %v330, 80
        %v2060 = vpop.permute.xlu0 %2059
        %2061 = vrot.lane.b32.xlu0 %v333, 80
        %v2062 = vpop.permute.xlu0 %2061
        %2063 = vrot.lane.b32.xlu0 %v336, 80
        %v2064 = vpop.permute.xlu0 %2063
        %2065 = vrot.lane.b32.xlu0 %v339, 80
        %v2066 = vpop.permute.xlu0 %2065
        %2067 = vrot.lane.b32.xlu0 %v318, 16
        %v2068 = vpop.permute.xlu0 %2067
        %2069 = vrot.lane.b32.xlu0 %v321, 16
        %v2070 = vpop.permute.xlu0 %2069
        %2071 = vrot.lane.b32.xlu0 %v324, 16
        %v2072 = vpop.permute.xlu0 %2071
        %2073 = vrot.lane.b32.xlu0 %v327, 16
        %v2074 = vpop.permute.xlu0 %2073
        %2075 = vrot.lane.b32.xlu0 %v330, 16
        %v2076 = vpop.permute.xlu0 %2075
        %2077 = vrot.lane.b32.xlu0 %v333, 16
        %v2078 = vpop.permute.xlu0 %2077
        %2079 = vrot.lane.b32.xlu0 %v336, 16
        %v2080 = vpop.permute.xlu0 %2079
        %2081 = vrot.lane.b32.xlu0 %v339, 16
        %v2082 = vpop.permute.xlu0 %2081
        %v2083 = vsel %vm406, %v2052, 0
        %v2085 = vsel %vm406, %v2054, 0
        %v2087 = vsel %vm406, %v2056, 0
        %v2089 = vsel %vm406, %v2058, 0
        %v2091 = vsel %vm406, %v2060, 0
        %v2093 = vsel %vm406, %v2062, 0
        %v2095 = vsel %vm406, %v2064, 0
        %v2097 = vsel %vm406, %v2066, 0
        %v2099 = vsel %vm406, %v2068, 0
        %v2101 = vsel %vm406, %v2070, 0
        %v2103 = vsel %vm406, %v2072, 0
        %v2105 = vsel %vm406, %v2074, 0
        %v2107 = vsel %vm406, %v2076, 0
        %v2109 = vsel %vm406, %v2078, 0
        %v2111 = vsel %vm406, %v2080, 0
        %v2113 = vsel %vm406, %v2082, 0
        %2115 = vmatpush.xpose.msra.mxu0 0.0
        %2116 = vmatpush.xpose.msra.mxu0 0.0
        %2117 = vmatpush.xpose.msra.mxu0 0.0
        %2118 = vmatpush.xpose.msra.mxu0 0.0
        %2119 = vmatpush.xpose.msra.mxu0 0.0
        %2120 = vmatpush.xpose.msra.mxu0 0.0
        %2121 = vmatpush.xpose.msra.mxu0 0.0
        %2122 = vmatpush.xpose.msra.mxu0 0.0
        %2123 = vmatpush.xpose.msra.mxu0 %v2113
        %2124 = vmatpush.xpose.msra.mxu0 %v2111
        %2125 = vmatpush.xpose.msra.mxu0 %v2109
        %2126 = vmatpush.xpose.msra.mxu0 %v2107
        %2127 = vmatpush.xpose.msra.mxu0 %v2105
        %2128 = vmatpush.xpose.msra.mxu0 %v2103
        %2129 = vmatpush.xpose.msra.mxu0 %v2101
        %2130 = vmatpush.xpose.msra.mxu0 %v2099
        %2131 = vmatmul.f32.gmra.mxu0 %v2083
        %v2132 = vpop.f32.mrf.mxu0
        %v2133 = vadd.f32 0.0, %v2132
        %2134 = vmatmul.f32.gmra.mxu0 %v2085
        %v2135 = vpop.f32.mrf.mxu0
        %v2136 = vadd.f32 0.0, %v2135
        %2137 = vmatmul.f32.gmra.mxu0 %v2087
        %v2138 = vpop.f32.mrf.mxu0
        %v2139 = vadd.f32 0.0, %v2138
        %2140 = vmatmul.f32.gmra.mxu0 %v2089
        %v2141 = vpop.f32.mrf.mxu0
        %v2142 = vadd.f32 0.0, %v2141
        %2143 = vmatmul.f32.gmra.mxu0 %v2091
        %v2144 = vpop.f32.mrf.mxu0
        %v2145 = vadd.f32 0.0, %v2144
        %2146 = vmatmul.f32.gmra.mxu0 %v2093
        %v2147 = vpop.f32.mrf.mxu0
        %v2148 = vadd.f32 0.0, %v2147
        %2149 = vmatmul.f32.gmra.mxu0 %v2095
        %v2150 = vpop.f32.mrf.mxu0
        %v2151 = vadd.f32 0.0, %v2150
        %2152 = vmatmul.f32.gmra.mxu0 %v2097
        %v2153 = vpop.f32.mrf.mxu0
        %v2154 = vadd.f32 0.0, %v2153
        %2155 = vdwg.mxu0
        %v2156 = vsel %vm275, %v2133, -inf
        %2157 = vmax.xlane.f32.xlu0 %v2156
        %v2158 = vpop.xlane.xlu0 %2157
        %v2159 = vsel %vm275, %v2136, -inf
        %2160 = vmax.xlane.f32.xlu0 %v2159
        %v2161 = vpop.xlane.xlu0 %2160
        %v2162 = vsel %vm275, %v2139, -inf
        %2163 = vmax.xlane.f32.xlu0 %v2162
        %v2164 = vpop.xlane.xlu0 %2163
        %v2165 = vsel %vm275, %v2142, -inf
        %2166 = vmax.xlane.f32.xlu0 %v2165
        %v2167 = vpop.xlane.xlu0 %2166
        %v2168 = vsel %vm275, %v2145, -inf
        %2169 = vmax.xlane.f32.xlu0 %v2168
        %v2170 = vpop.xlane.xlu0 %2169
        %v2171 = vsel %vm275, %v2148, -inf
        %2172 = vmax.xlane.f32.xlu0 %v2171
        %v2173 = vpop.xlane.xlu0 %2172
        %v2174 = vsel %vm275, %v2151, -inf
        %2175 = vmax.xlane.f32.xlu0 %v2174
        %v2176 = vpop.xlane.xlu0 %2175
        %v2177 = vsel %vm275, %v2154, -inf
        %2178 = vmax.xlane.f32.xlu0 %v2177
        %v2179 = vpop.xlane.xlu0 %2178
        %v2180 = vsub.f32 %v2133, %v2158
        %v2181 = vsub.f32 %v2136, %v2161
        %v2182 = vsub.f32 %v2139, %v2164
        %v2183 = vsub.f32 %v2142, %v2167
        %v2184 = vsub.f32 %v2145, %v2170
        %v2185 = vsub.f32 %v2148, %v2173
        %v2186 = vsub.f32 %v2151, %v2176
        %v2187 = vsub.f32 %v2154, %v2179
        %v2188 = vmul.f32 %v2180, 1.442695
        %v2189 = vpow.pop %v2188
        %v2190 = vmul.f32 %v2181, 1.442695
        %v2191 = vpow.pop %v2190
        %v2192 = vmul.f32 %v2182, 1.442695
        %v2193 = vpow.pop %v2192
        %v2194 = vmul.f32 %v2183, 1.442695
        %v2195 = vpow.pop %v2194
        %v2196 = vmul.f32 %v2184, 1.442695
        %v2197 = vpow.pop %v2196
        %v2198 = vmul.f32 %v2185, 1.442695
        %v2199 = vpow.pop %v2198
        %v2200 = vmul.f32 %v2186, 1.442695
        %v2201 = vpow.pop %v2200
        %v2202 = vmul.f32 %v2187, 1.442695
        %v2203 = vpow.pop %v2202
        %v2204 = vsel %vm275, %v2189, 0.0
        %2205 = vadd.xlane.f32.xlu0 %v2204
        %v2206 = vpop.xlane.xlu0 %2205
        %v2207 = vsel %vm275, %v2191, 0.0
        %2208 = vadd.xlane.f32.xlu0 %v2207
        %v2209 = vpop.xlane.xlu0 %2208
        %v2210 = vsel %vm275, %v2193, 0.0
        %2211 = vadd.xlane.f32.xlu0 %v2210
        %v2212 = vpop.xlane.xlu0 %2211
        %v2213 = vsel %vm275, %v2195, 0.0
        %2214 = vadd.xlane.f32.xlu0 %v2213
        %v2215 = vpop.xlane.xlu0 %2214
        %v2216 = vsel %vm275, %v2197, 0.0
        %2217 = vadd.xlane.f32.xlu0 %v2216
        %v2218 = vpop.xlane.xlu0 %2217
        %v2219 = vsel %vm275, %v2199, 0.0
        %2220 = vadd.xlane.f32.xlu0 %v2219
        %v2221 = vpop.xlane.xlu0 %2220
        %v2222 = vsel %vm275, %v2201, 0.0
        %2223 = vadd.xlane.f32.xlu0 %v2222
        %v2224 = vpop.xlane.xlu0 %2223
        %v2225 = vsel %vm275, %v2203, 0.0
        %2226 = vadd.xlane.f32.xlu0 %v2225
        %v2227 = vpop.xlane.xlu0 %2226
        %v2228 = vrcp.pop %v2206
        %v2229 = vrcp.pop %v2209
        %v2230 = vrcp.pop %v2212
        %v2231 = vrcp.pop %v2215
        %v2232 = vrcp.pop %v2218
        %v2233 = vrcp.pop %v2221
        %v2234 = vrcp.pop %v2224
        %v2235 = vrcp.pop %v2227
        %v2236 = vmul.f32 %v2189, %v2228
        %v2237 = vmul.f32 %v2191, %v2229
        %v2238 = vmul.f32 %v2193, %v2230
        %v2239 = vmul.f32 %v2195, %v2231
        %v2240 = vmul.f32 %v2197, %v2232
        %v2241 = vmul.f32 %v2199, %v2233
        %v2242 = vmul.f32 %v2201, %v2234
        %v2243 = vmul.f32 %v2203, %v2235
        %2244 = vrot.lane.b32.xlu0 %v359, 80
        %v2245 = vpop.permute.xlu0 %2244
        %2246 = vrot.lane.b32.xlu0 %v362, 80
        %v2247 = vpop.permute.xlu0 %2246
        %2248 = vrot.lane.b32.xlu0 %v365, 80
        %v2249 = vpop.permute.xlu0 %2248
        %2250 = vrot.lane.b32.xlu0 %v368, 80
        %v2251 = vpop.permute.xlu0 %2250
        %2252 = vrot.lane.b32.xlu0 %v371, 80
        %v2253 = vpop.permute.xlu0 %2252
        %2254 = vrot.lane.b32.xlu0 %v374, 80
        %v2255 = vpop.permute.xlu0 %2254
        %2256 = vrot.lane.b32.xlu0 %v377, 80
        %v2257 = vpop.permute.xlu0 %2256
        %2258 = vrot.lane.b32.xlu0 %v380, 80
        %v2259 = vpop.permute.xlu0 %2258
        %v2269 = vsel %vm275, %v2236, 0
        %v2272 = vsel %vm275, %v2237, 0
        %v2275 = vsel %vm275, %v2238, 0
        %v2278 = vsel %vm275, %v2239, 0
        %v2281 = vsel %vm275, %v2240, 0
        %v2284 = vsel %vm275, %v2241, 0
        %v2287 = vsel %vm275, %v2242, 0
        %v2290 = vsel %vm275, %v2243, 0
        %2292 = vmatpush.msra.mxu0 0.0
        %2293 = vmatpush.msra.mxu0 0.0
        %2294 = vmatpush.msra.mxu0 0.0
        %2295 = vmatpush.msra.mxu0 0.0
        %2296 = vmatpush.msra.mxu0 0.0
        %2297 = vmatpush.msra.mxu0 0.0
        %2298 = vmatpush.msra.mxu0 0.0
        %2299 = vmatpush.msra.mxu0 0.0
        %2300 = vmatpush.msra.mxu0 %v2259
        %2301 = vmatpush.msra.mxu0 %v2257
        %2302 = vmatpush.msra.mxu0 %v2255
        %2303 = vmatpush.msra.mxu0 %v2253
        %2304 = vmatpush.msra.mxu0 %v2251
        %2305 = vmatpush.msra.mxu0 %v2249
        %2306 = vmatpush.msra.mxu0 %v2247
        %2307 = vmatpush.msra.mxu0 %v2245
        %2308 = vmatmul.f32.gmra.mxu0 %v2269
        %v2309 = vpop.f32.mrf.mxu0
        %v2310 = vadd.f32 0.0, %v2309
        %2311 = vmatmul.f32.gmra.mxu0 %v2272
        %v2312 = vpop.f32.mrf.mxu0
        %v2313 = vadd.f32 0.0, %v2312
        %2314 = vmatmul.f32.gmra.mxu0 %v2275
        %v2315 = vpop.f32.mrf.mxu0
        %v2316 = vadd.f32 0.0, %v2315
        %2317 = vmatmul.f32.gmra.mxu0 %v2278
        %v2318 = vpop.f32.mrf.mxu0
        %v2319 = vadd.f32 0.0, %v2318
        %2320 = vmatmul.f32.gmra.mxu0 %v2281
        %v2321 = vpop.f32.mrf.mxu0
        %v2322 = vadd.f32 0.0, %v2321
        %2323 = vmatmul.f32.gmra.mxu0 %v2284
        %v2324 = vpop.f32.mrf.mxu0
        %v2325 = vadd.f32 0.0, %v2324
        %2326 = vmatmul.f32.gmra.mxu0 %v2287
        %v2327 = vpop.f32.mrf.mxu0
        %v2328 = vadd.f32 0.0, %v2327
        %2329 = vmatmul.f32.gmra.mxu0 %v2290
        %v2330 = vpop.f32.mrf.mxu0
        %v2331 = vadd.f32 0.0, %v2330
        %2332 = vdwg.mxu0
        %2333 = vrot.lane.b32.xlu0 %v318, 72
        %v2334 = vpop.permute.xlu0 %2333
        %2335 = vrot.lane.b32.xlu0 %v321, 72
        %v2336 = vpop.permute.xlu0 %2335
        %2337 = vrot.lane.b32.xlu0 %v324, 72
        %v2338 = vpop.permute.xlu0 %2337
        %2339 = vrot.lane.b32.xlu0 %v327, 72
        %v2340 = vpop.permute.xlu0 %2339
        %2341 = vrot.lane.b32.xlu0 %v330, 72
        %v2342 = vpop.permute.xlu0 %2341
        %2343 = vrot.lane.b32.xlu0 %v333, 72
        %v2344 = vpop.permute.xlu0 %2343
        %2345 = vrot.lane.b32.xlu0 %v336, 72
        %v2346 = vpop.permute.xlu0 %2345
        %2347 = vrot.lane.b32.xlu0 %v339, 72
        %v2348 = vpop.permute.xlu0 %2347
        %2349 = vrot.lane.b32.xlu0 %v318, 8
        %v2350 = vpop.permute.xlu0 %2349
        %2351 = vrot.lane.b32.xlu0 %v321, 8
        %v2352 = vpop.permute.xlu0 %2351
        %2353 = vrot.lane.b32.xlu0 %v324, 8
        %v2354 = vpop.permute.xlu0 %2353
        %2355 = vrot.lane.b32.xlu0 %v327, 8
        %v2356 = vpop.permute.xlu0 %2355
        %2357 = vrot.lane.b32.xlu0 %v330, 8
        %v2358 = vpop.permute.xlu0 %2357
        %2359 = vrot.lane.b32.xlu0 %v333, 8
        %v2360 = vpop.permute.xlu0 %2359
        %2361 = vrot.lane.b32.xlu0 %v336, 8
        %v2362 = vpop.permute.xlu0 %2361
        %2363 = vrot.lane.b32.xlu0 %v339, 8
        %v2364 = vpop.permute.xlu0 %2363
        %v2365 = vsel %vm406, %v2334, 0
        %v2367 = vsel %vm406, %v2336, 0
        %v2369 = vsel %vm406, %v2338, 0
        %v2371 = vsel %vm406, %v2340, 0
        %v2373 = vsel %vm406, %v2342, 0
        %v2375 = vsel %vm406, %v2344, 0
        %v2377 = vsel %vm406, %v2346, 0
        %v2379 = vsel %vm406, %v2348, 0
        %v2381 = vsel %vm406, %v2350, 0
        %v2383 = vsel %vm406, %v2352, 0
        %v2385 = vsel %vm406, %v2354, 0
        %v2387 = vsel %vm406, %v2356, 0
        %v2389 = vsel %vm406, %v2358, 0
        %v2391 = vsel %vm406, %v2360, 0
        %v2393 = vsel %vm406, %v2362, 0
        %v2395 = vsel %vm406, %v2364, 0
        %2397 = vmatpush.xpose.msra.mxu0 0.0
        %2398 = vmatpush.xpose.msra.mxu0 0.0
        %2399 = vmatpush.xpose.msra.mxu0 0.0
        %2400 = vmatpush.xpose.msra.mxu0 0.0
        %2401 = vmatpush.xpose.msra.mxu0 0.0
        %2402 = vmatpush.xpose.msra.mxu0 0.0
        %2403 = vmatpush.xpose.msra.mxu0 0.0
        %2404 = vmatpush.xpose.msra.mxu0 0.0
        %2405 = vmatpush.xpose.msra.mxu0 %v2395
        %2406 = vmatpush.xpose.msra.mxu0 %v2393
        %2407 = vmatpush.xpose.msra.mxu0 %v2391
        %2408 = vmatpush.xpose.msra.mxu0 %v2389
        %2409 = vmatpush.xpose.msra.mxu0 %v2387
        %2410 = vmatpush.xpose.msra.mxu0 %v2385
        %2411 = vmatpush.xpose.msra.mxu0 %v2383
        %2412 = vmatpush.xpose.msra.mxu0 %v2381
        %2413 = vmatmul.f32.gmra.mxu0 %v2365
        %v2414 = vpop.f32.mrf.mxu0
        %v2415 = vadd.f32 0.0, %v2414
        %2416 = vmatmul.f32.gmra.mxu0 %v2367
        %v2417 = vpop.f32.mrf.mxu0
        %v2418 = vadd.f32 0.0, %v2417
        %2419 = vmatmul.f32.gmra.mxu0 %v2369
        %v2420 = vpop.f32.mrf.mxu0
        %v2421 = vadd.f32 0.0, %v2420
        %2422 = vmatmul.f32.gmra.mxu0 %v2371
        %v2423 = vpop.f32.mrf.mxu0
        %v2424 = vadd.f32 0.0, %v2423
        %2425 = vmatmul.f32.gmra.mxu0 %v2373
        %v2426 = vpop.f32.mrf.mxu0
        %v2427 = vadd.f32 0.0, %v2426
        %2428 = vmatmul.f32.gmra.mxu0 %v2375
        %v2429 = vpop.f32.mrf.mxu0
        %v2430 = vadd.f32 0.0, %v2429
        %2431 = vmatmul.f32.gmra.mxu0 %v2377
        %v2432 = vpop.f32.mrf.mxu0
        %v2433 = vadd.f32 0.0, %v2432
        %2434 = vmatmul.f32.gmra.mxu0 %v2379
        %v2435 = vpop.f32.mrf.mxu0
        %v2436 = vadd.f32 0.0, %v2435
        %2437 = vdwg.mxu0
        %v2438 = vsel %vm275, %v2415, -inf
        %2439 = vmax.xlane.f32.xlu0 %v2438
        %v2440 = vpop.xlane.xlu0 %2439
        %v2441 = vsel %vm275, %v2418, -inf
        %2442 = vmax.xlane.f32.xlu0 %v2441
        %v2443 = vpop.xlane.xlu0 %2442
        %v2444 = vsel %vm275, %v2421, -inf
        %2445 = vmax.xlane.f32.xlu0 %v2444
        %v2446 = vpop.xlane.xlu0 %2445
        %v2447 = vsel %vm275, %v2424, -inf
        %2448 = vmax.xlane.f32.xlu0 %v2447
        %v2449 = vpop.xlane.xlu0 %2448
        %v2450 = vsel %vm275, %v2427, -inf
        %2451 = vmax.xlane.f32.xlu0 %v2450
        %v2452 = vpop.xlane.xlu0 %2451
        %v2453 = vsel %vm275, %v2430, -inf
        %2454 = vmax.xlane.f32.xlu0 %v2453
        %v2455 = vpop.xlane.xlu0 %2454
        %v2456 = vsel %vm275, %v2433, -inf
        %2457 = vmax.xlane.f32.xlu0 %v2456
        %v2458 = vpop.xlane.xlu0 %2457
        %v2459 = vsel %vm275, %v2436, -inf
        %2460 = vmax.xlane.f32.xlu0 %v2459
        %v2461 = vpop.xlane.xlu0 %2460
        %v2462 = vsub.f32 %v2415, %v2440
        %v2463 = vsub.f32 %v2418, %v2443
        %v2464 = vsub.f32 %v2421, %v2446
        %v2465 = vsub.f32 %v2424, %v2449
        %v2466 = vsub.f32 %v2427, %v2452
        %v2467 = vsub.f32 %v2430, %v2455
        %v2468 = vsub.f32 %v2433, %v2458
        %v2469 = vsub.f32 %v2436, %v2461
        %v2470 = vmul.f32 %v2462, 1.442695
        %v2471 = vpow.pop %v2470
        %v2472 = vmul.f32 %v2463, 1.442695
        %v2473 = vpow.pop %v2472
        %v2474 = vmul.f32 %v2464, 1.442695
        %v2475 = vpow.pop %v2474
        %v2476 = vmul.f32 %v2465, 1.442695
        %v2477 = vpow.pop %v2476
        %v2478 = vmul.f32 %v2466, 1.442695
        %v2479 = vpow.pop %v2478
        %v2480 = vmul.f32 %v2467, 1.442695
        %v2481 = vpow.pop %v2480
        %v2482 = vmul.f32 %v2468, 1.442695
        %v2483 = vpow.pop %v2482
        %v2484 = vmul.f32 %v2469, 1.442695
        %v2485 = vpow.pop %v2484
        %v2486 = vsel %vm275, %v2471, 0.0
        %2487 = vadd.xlane.f32.xlu0 %v2486
        %v2488 = vpop.xlane.xlu0 %2487
        %v2489 = vsel %vm275, %v2473, 0.0
        %2490 = vadd.xlane.f32.xlu0 %v2489
        %v2491 = vpop.xlane.xlu0 %2490
        %v2492 = vsel %vm275, %v2475, 0.0
        %2493 = vadd.xlane.f32.xlu0 %v2492
        %v2494 = vpop.xlane.xlu0 %2493
        %v2495 = vsel %vm275, %v2477, 0.0
        %2496 = vadd.xlane.f32.xlu0 %v2495
        %v2497 = vpop.xlane.xlu0 %2496
        %v2498 = vsel %vm275, %v2479, 0.0
        %2499 = vadd.xlane.f32.xlu0 %v2498
        %v2500 = vpop.xlane.xlu0 %2499
        %v2501 = vsel %vm275, %v2481, 0.0
        %2502 = vadd.xlane.f32.xlu0 %v2501
        %v2503 = vpop.xlane.xlu0 %2502
        %v2504 = vsel %vm275, %v2483, 0.0
        %2505 = vadd.xlane.f32.xlu0 %v2504
        %v2506 = vpop.xlane.xlu0 %2505
        %v2507 = vsel %vm275, %v2485, 0.0
        %2508 = vadd.xlane.f32.xlu0 %v2507
        %v2509 = vpop.xlane.xlu0 %2508
        %v2510 = vrcp.pop %v2488
        %v2511 = vrcp.pop %v2491
        %v2512 = vrcp.pop %v2494
        %v2513 = vrcp.pop %v2497
        %v2514 = vrcp.pop %v2500
        %v2515 = vrcp.pop %v2503
        %v2516 = vrcp.pop %v2506
        %v2517 = vrcp.pop %v2509
        %v2518 = vmul.f32 %v2471, %v2510
        %v2519 = vmul.f32 %v2473, %v2511
        %v2520 = vmul.f32 %v2475, %v2512
        %v2521 = vmul.f32 %v2477, %v2513
        %v2522 = vmul.f32 %v2479, %v2514
        %v2523 = vmul.f32 %v2481, %v2515
        %v2524 = vmul.f32 %v2483, %v2516
        %v2525 = vmul.f32 %v2485, %v2517
        %2526 = vrot.lane.b32.xlu0 %v359, 72
        %v2527 = vpop.permute.xlu0 %2526
        %2528 = vrot.lane.b32.xlu0 %v362, 72
        %v2529 = vpop.permute.xlu0 %2528
        %2530 = vrot.lane.b32.xlu0 %v365, 72
        %v2531 = vpop.permute.xlu0 %2530
        %2532 = vrot.lane.b32.xlu0 %v368, 72
        %v2533 = vpop.permute.xlu0 %2532
        %2534 = vrot.lane.b32.xlu0 %v371, 72
        %v2535 = vpop.permute.xlu0 %2534
        %2536 = vrot.lane.b32.xlu0 %v374, 72
        %v2537 = vpop.permute.xlu0 %2536
        %2538 = vrot.lane.b32.xlu0 %v377, 72
        %v2539 = vpop.permute.xlu0 %2538
        %2540 = vrot.lane.b32.xlu0 %v380, 72
        %v2541 = vpop.permute.xlu0 %2540
        %v2551 = vsel %vm275, %v2518, 0
        %v2554 = vsel %vm275, %v2519, 0
        %v2557 = vsel %vm275, %v2520, 0
        %v2560 = vsel %vm275, %v2521, 0
        %v2563 = vsel %vm275, %v2522, 0
        %v2566 = vsel %vm275, %v2523, 0
        %v2569 = vsel %vm275, %v2524, 0
        %v2572 = vsel %vm275, %v2525, 0
        %2574 = vmatpush.msra.mxu0 0.0
        %2575 = vmatpush.msra.mxu0 0.0
        %2576 = vmatpush.msra.mxu0 0.0
        %2577 = vmatpush.msra.mxu0 0.0
        %2578 = vmatpush.msra.mxu0 0.0
        %2579 = vmatpush.msra.mxu0 0.0
        %2580 = vmatpush.msra.mxu0 0.0
        %2581 = vmatpush.msra.mxu0 0.0
        %2582 = vmatpush.msra.mxu0 %v2541
        %2583 = vmatpush.msra.mxu0 %v2539
        %2584 = vmatpush.msra.mxu0 %v2537
        %2585 = vmatpush.msra.mxu0 %v2535
        %2586 = vmatpush.msra.mxu0 %v2533
        %2587 = vmatpush.msra.mxu0 %v2531
        %2588 = vmatpush.msra.mxu0 %v2529
        %2589 = vmatpush.msra.mxu0 %v2527
        %2590 = vmatmul.f32.gmra.mxu0 %v2551
        %v2591 = vpop.f32.mrf.mxu0
        %v2592 = vadd.f32 0.0, %v2591
        %2593 = vmatmul.f32.gmra.mxu0 %v2554
        %v2594 = vpop.f32.mrf.mxu0
        %v2595 = vadd.f32 0.0, %v2594
        %2596 = vmatmul.f32.gmra.mxu0 %v2557
        %v2597 = vpop.f32.mrf.mxu0
        %v2598 = vadd.f32 0.0, %v2597
        %2599 = vmatmul.f32.gmra.mxu0 %v2560
        %v2600 = vpop.f32.mrf.mxu0
        %v2601 = vadd.f32 0.0, %v2600
        %2602 = vmatmul.f32.gmra.mxu0 %v2563
        %v2603 = vpop.f32.mrf.mxu0
        %v2604 = vadd.f32 0.0, %v2603
        %2605 = vmatmul.f32.gmra.mxu0 %v2566
        %v2606 = vpop.f32.mrf.mxu0
        %v2607 = vadd.f32 0.0, %v2606
        %2608 = vmatmul.f32.gmra.mxu0 %v2569
        %v2609 = vpop.f32.mrf.mxu0
        %v2610 = vadd.f32 0.0, %v2609
        %2611 = vmatmul.f32.gmra.mxu0 %v2572
        %v2612 = vpop.f32.mrf.mxu0
        %v2613 = vadd.f32 0.0, %v2612
        %2614 = vdwg.mxu0
        %2623 = vrot.lane.b32.xlu0 %v900, 8
        %v2624 = vpop.permute.xlu0 %2623
        %2625 = vrot.lane.b32.xlu0 %v903, 8
        %v2626 = vpop.permute.xlu0 %2625
        %2627 = vrot.lane.b32.xlu0 %v906, 8
        %v2628 = vpop.permute.xlu0 %2627
        %2629 = vrot.lane.b32.xlu0 %v909, 8
        %v2630 = vpop.permute.xlu0 %2629
        %2631 = vrot.lane.b32.xlu0 %v912, 8
        %v2632 = vpop.permute.xlu0 %2631
        %2633 = vrot.lane.b32.xlu0 %v915, 8
        %v2634 = vpop.permute.xlu0 %2633
        %2635 = vrot.lane.b32.xlu0 %v918, 8
        %v2636 = vpop.permute.xlu0 %2635
        %2637 = vrot.lane.b32.xlu0 %v921, 8
        %v2638 = vpop.permute.xlu0 %2637
        %2655 = vrot.lane.b32.xlu0 %v1182, 16
        %v2656 = vpop.permute.xlu0 %2655
        %2657 = vrot.lane.b32.xlu0 %v1185, 16
        %v2658 = vpop.permute.xlu0 %2657
        %2659 = vrot.lane.b32.xlu0 %v1188, 16
        %v2660 = vpop.permute.xlu0 %2659
        %2661 = vrot.lane.b32.xlu0 %v1191, 16
        %v2662 = vpop.permute.xlu0 %2661
        %2663 = vrot.lane.b32.xlu0 %v1194, 16
        %v2664 = vpop.permute.xlu0 %2663
        %2665 = vrot.lane.b32.xlu0 %v1197, 16
        %v2666 = vpop.permute.xlu0 %2665
        %2667 = vrot.lane.b32.xlu0 %v1200, 16
        %v2668 = vpop.permute.xlu0 %2667
        %2669 = vrot.lane.b32.xlu0 %v1203, 16
        %v2670 = vpop.permute.xlu0 %2669
        %2687 = vrot.lane.b32.xlu0 %v1464, 24
        %v2688 = vpop.permute.xlu0 %2687
        %2689 = vrot.lane.b32.xlu0 %v1467, 24
        %v2690 = vpop.permute.xlu0 %2689
        %2691 = vrot.lane.b32.xlu0 %v1470, 24
        %v2692 = vpop.permute.xlu0 %2691
        %2693 = vrot.lane.b32.xlu0 %v1473, 24
        %v2694 = vpop.permute.xlu0 %2693
        %2695 = vrot.lane.b32.xlu0 %v1476, 24
        %v2696 = vpop.permute.xlu0 %2695
        %2697 = vrot.lane.b32.xlu0 %v1479, 24
        %v2698 = vpop.permute.xlu0 %2697
        %2699 = vrot.lane.b32.xlu0 %v1482, 24
        %v2700 = vpop.permute.xlu0 %2699
        %2701 = vrot.lane.b32.xlu0 %v1485, 24
        %v2702 = vpop.permute.xlu0 %2701
        %2719 = vrot.lane.b32.xlu0 %v1746, 32
        %v2720 = vpop.permute.xlu0 %2719
        %2721 = vrot.lane.b32.xlu0 %v1749, 32
        %v2722 = vpop.permute.xlu0 %2721
        %2723 = vrot.lane.b32.xlu0 %v1752, 32
        %v2724 = vpop.permute.xlu0 %2723
        %2725 = vrot.lane.b32.xlu0 %v1755, 32
        %v2726 = vpop.permute.xlu0 %2725
        %2727 = vrot.lane.b32.xlu0 %v1758, 32
        %v2728 = vpop.permute.xlu0 %2727
        %2729 = vrot.lane.b32.xlu0 %v1761, 32
        %v2730 = vpop.permute.xlu0 %2729
        %2731 = vrot.lane.b32.xlu0 %v1764, 32
        %v2732 = vpop.permute.xlu0 %2731
        %2733 = vrot.lane.b32.xlu0 %v1767, 32
        %v2734 = vpop.permute.xlu0 %2733
        %2751 = vrot.lane.b32.xlu0 %v2028, 40
        %v2752 = vpop.permute.xlu0 %2751
        %2753 = vrot.lane.b32.xlu0 %v2031, 40
        %v2754 = vpop.permute.xlu0 %2753
        %2755 = vrot.lane.b32.xlu0 %v2034, 40
        %v2756 = vpop.permute.xlu0 %2755
        %2757 = vrot.lane.b32.xlu0 %v2037, 40
        %v2758 = vpop.permute.xlu0 %2757
        %2759 = vrot.lane.b32.xlu0 %v2040, 40
        %v2760 = vpop.permute.xlu0 %2759
        %2761 = vrot.lane.b32.xlu0 %v2043, 40
        %v2762 = vpop.permute.xlu0 %2761
        %2763 = vrot.lane.b32.xlu0 %v2046, 40
        %v2764 = vpop.permute.xlu0 %2763
        %2765 = vrot.lane.b32.xlu0 %v2049, 40
        %v2766 = vpop.permute.xlu0 %2765
        %2783 = vrot.lane.b32.xlu0 %v2310, 48
        %v2784 = vpop.permute.xlu0 %2783
        %2785 = vrot.lane.b32.xlu0 %v2313, 48
        %v2786 = vpop.permute.xlu0 %2785
        %2787 = vrot.lane.b32.xlu0 %v2316, 48
        %v2788 = vpop.permute.xlu0 %2787
        %2789 = vrot.lane.b32.xlu0 %v2319, 48
        %v2790 = vpop.permute.xlu0 %2789
        %2791 = vrot.lane.b32.xlu0 %v2322, 48
        %v2792 = vpop.permute.xlu0 %2791
        %2793 = vrot.lane.b32.xlu0 %v2325, 48
        %v2794 = vpop.permute.xlu0 %2793
        %2795 = vrot.lane.b32.xlu0 %v2328, 48
        %v2796 = vpop.permute.xlu0 %2795
        %2797 = vrot.lane.b32.xlu0 %v2331, 48
        %v2798 = vpop.permute.xlu0 %2797
        %2815 = vrot.lane.b32.xlu0 %v2592, 56
        %v2816 = vpop.permute.xlu0 %2815
        %2817 = vrot.lane.b32.xlu0 %v2595, 56
        %v2818 = vpop.permute.xlu0 %2817
        %2819 = vrot.lane.b32.xlu0 %v2598, 56
        %v2820 = vpop.permute.xlu0 %2819
        %2821 = vrot.lane.b32.xlu0 %v2601, 56
        %v2822 = vpop.permute.xlu0 %2821
        %2823 = vrot.lane.b32.xlu0 %v2604, 56
        %v2824 = vpop.permute.xlu0 %2823
        %2825 = vrot.lane.b32.xlu0 %v2607, 56
        %v2826 = vpop.permute.xlu0 %2825
        %2827 = vrot.lane.b32.xlu0 %v2610, 56
        %v2828 = vpop.permute.xlu0 %2827
        %2829 = vrot.lane.b32.xlu0 %v2613, 56
        %v2830 = vpop.permute.xlu0 %2829
        %v2839 = vsel %vm406, %v610, %v2624
        %v2840 = vsel %vm406, %v613, %v2626
        %v2841 = vsel %vm406, %v616, %v2628
        %v2842 = vsel %vm406, %v619, %v2630
        %v2843 = vsel %vm406, %v622, %v2632
        %v2844 = vsel %vm406, %v625, %v2634
        %v2845 = vsel %vm406, %v628, %v2636
        %v2846 = vsel %vm406, %v631, %v2638
        %vm2847 = vcmask 130048
        %v2848 = vsel %vm2847, %v2839, %v2656
        %v2849 = vsel %vm2847, %v2840, %v2658
        %v2850 = vsel %vm2847, %v2841, %v2660
        %v2851 = vsel %vm2847, %v2842, %v2662
        %v2852 = vsel %vm2847, %v2843, %v2664
        %v2853 = vsel %vm2847, %v2844, %v2666
        %v2854 = vsel %vm2847, %v2845, %v2668
        %v2855 = vsel %vm2847, %v2846, %v2670
        %vm2856 = vcmask 195584
        %v2857 = vsel %vm2856, %v2848, %v2688
        %v2858 = vsel %vm2856, %v2849, %v2690
        %v2859 = vsel %vm2856, %v2850, %v2692
        %v2860 = vsel %vm2856, %v2851, %v2694
        %v2861 = vsel %vm2856, %v2852, %v2696
        %v2862 = vsel %vm2856, %v2853, %v2698
        %v2863 = vsel %vm2856, %v2854, %v2700
        %v2864 = vsel %vm2856, %v2855, %v2702
        %vm2865 = vcmask 261120
        %v2866 = vsel %vm2865, %v2857, %v2720
        %v2867 = vsel %vm2865, %v2858, %v2722
        %v2868 = vsel %vm2865, %v2859, %v2724
        %v2869 = vsel %vm2865, %v2860, %v2726
        %v2870 = vsel %vm2865, %v2861, %v2728
        %v2871 = vsel %vm2865, %v2862, %v2730
        %v2872 = vsel %vm2865, %v2863, %v2732
        %v2873 = vsel %vm2865, %v2864, %v2734
        %vm2874 = vcmask 326656
        %v2875 = vsel %vm2874, %v2866, %v2752
        %v2876 = vsel %vm2874, %v2867, %v2754
        %v2877 = vsel %vm2874, %v2868, %v2756
        %v2878 = vsel %vm2874, %v2869, %v2758
        %v2879 = vsel %vm2874, %v2870, %v2760
        %v2880 = vsel %vm2874, %v2871, %v2762
        %v2881 = vsel %vm2874, %v2872, %v2764
        %v2882 = vsel %vm2874, %v2873, %v2766
        %vm2883 = vcmask 392192
        %v2884 = vsel %vm2883, %v2875, %v2784
        %v2885 = vsel %vm2883, %v2876, %v2786
        %v2886 = vsel %vm2883, %v2877, %v2788
        %v2887 = vsel %vm2883, %v2878, %v2790
        %v2888 = vsel %vm2883, %v2879, %v2792
        %v2889 = vsel %vm2883, %v2880, %v2794
        %v2890 = vsel %vm2883, %v2881, %v2796
        %v2891 = vsel %vm2883, %v2882, %v2798
        %vm2892 = vcmask 457728
        %v2893 = vsel %vm2892, %v2884, %v2816
        %v2894 = vsel %vm2892, %v2885, %v2818
        %v2895 = vsel %vm2892, %v2886, %v2820
        %v2896 = vsel %vm2892, %v2887, %v2822
        %v2897 = vsel %vm2892, %v2888, %v2824
        %v2898 = vsel %vm2892, %v2889, %v2826
        %v2899 = vsel %vm2892, %v2890, %v2828
        %v2900 = vsel %vm2892, %v2891, %v2830
        %v2901 = vld [vmem:[#allocation7] sm:$0xff]
        %v2902 = vld [vmem:[#allocation7 + $0x8] sm:$0xff]
        %v2903 = vld [vmem:[#allocation7 + $0x10] sm:$0xff]
        %v2904 = vld [vmem:[#allocation7 + $0x18] sm:$0xff]
        %v2905 = vld [vmem:[#allocation7 + $0x20] sm:$0xff]
        %v2906 = vld [vmem:[#allocation7 + $0x28] sm:$0xff]
        %v2907 = vld [vmem:[#allocation7 + $0x30] sm:$0xff]
        %v2908 = vld [vmem:[#allocation7 + $0x38] sm:$0xff]
        %v2909 = vld [vmem:[%s3] sm:$0x1]
        %v2911 = vperm.slane %v2909, 0
        %v2914 = vsel %vm275, %v2893, 0
        %v2917 = vsel %vm275, %v2894, 0
        %v2920 = vsel %vm275, %v2895, 0
        %v2923 = vsel %vm275, %v2896, 0
        %v2926 = vsel %vm275, %v2897, 0
        %v2929 = vsel %vm275, %v2898, 0
        %v2932 = vsel %vm275, %v2899, 0
        %v2935 = vsel %vm275, %v2900, 0
        %2937 = vmatpush.msra.mxu0 0.0
        %2938 = vmatpush.msra.mxu0 0.0
        %2939 = vmatpush.msra.mxu0 0.0
        %2940 = vmatpush.msra.mxu0 0.0
        %2941 = vmatpush.msra.mxu0 0.0
        %2942 = vmatpush.msra.mxu0 0.0
        %2943 = vmatpush.msra.mxu0 0.0
        %2944 = vmatpush.msra.mxu0 0.0
        %2945 = vmatpush.msra.mxu0 %v2908
        %2946 = vmatpush.msra.mxu0 %v2907
        %2947 = vmatpush.msra.mxu0 %v2906
        %2948 = vmatpush.msra.mxu0 %v2905
        %2949 = vmatpush.msra.mxu0 %v2904
        %2950 = vmatpush.msra.mxu0 %v2903
        %2951 = vmatpush.msra.mxu0 %v2902
        %2952 = vmatpush.msra.mxu0 %v2901
        %2953 = vmatmul.f32.gmra.mxu0 %v2914
        %v2954 = vpop.f32.mrf.mxu0
        %v2955 = vadd.f32 %v2911, %v2954
        %2956 = vmatmul.f32.gmra.mxu0 %v2917
        %v2957 = vpop.f32.mrf.mxu0
        %v2958 = vadd.f32 %v2911, %v2957
        %2959 = vmatmul.f32.gmra.mxu0 %v2920
        %v2960 = vpop.f32.mrf.mxu0
        %v2961 = vadd.f32 %v2911, %v2960
        %2962 = vmatmul.f32.gmra.mxu0 %v2923
        %v2963 = vpop.f32.mrf.mxu0
        %v2964 = vadd.f32 %v2911, %v2963
        %2965 = vmatmul.f32.gmra.mxu0 %v2926
        %v2966 = vpop.f32.mrf.mxu0
        %v2967 = vadd.f32 %v2911, %v2966
        %2968 = vmatmul.f32.gmra.mxu0 %v2929
        %v2969 = vpop.f32.mrf.mxu0
        %v2970 = vadd.f32 %v2911, %v2969
        %2971 = vmatmul.f32.gmra.mxu0 %v2932
        %v2972 = vpop.f32.mrf.mxu0
        %v2973 = vadd.f32 %v2911, %v2972
        %2974 = vmatmul.f32.gmra.mxu0 %v2935
        %v2975 = vpop.f32.mrf.mxu0
        %v2976 = vadd.f32 %v2911, %v2975
        %2977 = vdwg.mxu0
        %2978 = vst.msk [vmem:[%s250] sm:$0xff] %vm275, %v2955
        %2979 = vst.msk [vmem:[%s250 + $0x8] sm:$0xff] %vm275, %v2958
        %2980 = vst.msk [vmem:[%s250 + $0x10] sm:$0xff] %vm275, %v2961
        %2981 = vst.msk [vmem:[%s250 + $0x18] sm:$0xff] %vm275, %v2964
        %2982 = vst.msk [vmem:[%s250 + $0x20] sm:$0xff] %vm275, %v2967
        %2983 = vst.msk [vmem:[%s250 + $0x28] sm:$0xff] %vm275, %v2970
        %2984 = vst.msk [vmem:[%s250 + $0x30] sm:$0xff] %vm275, %v2973
        %2985 = vst.msk [vmem:[%s250 + $0x38] sm:$0xff] %vm275, %v2976
        %s2986 = sand.u32 %s119, 1
        %s2987 = scalar_lea.sflag [#allocation4], %s2986
        %s2988 = sand.u32 %s119, 1
        %s2989 = smul.addr %s2988, 64
        %s2990 = scalar_lea.vmem [#allocation8], %s2989
        // Predicated region
        $region49: #{attention2_forward.1} parent=35 // pred_check
          %p2991 = pneg %p129
        $region50: #{attention2_forward.1} parent=35 // pred_check_branch
          %2993 = sbr.rel (%p2991) target = $region52
        $region51: #{attention2_forward.1} parent=35 // pred_region
          %2995 = vsyncadd %s2987, 0
          %s2996 = smul.addr %s22, 8
          %s2997 = smul.addr %s2996, 8
          %s2998 = scalar_lea.hbm %s4, %s2997
          %s2999 = sshll.u32 %s2990, 4
          %s3000 = int_to_ptr.vmem [resolvable:$true] %s2999
          %s3001 = sshll.u32 %s2998, 4
          %s3002 = int_to_ptr.hbm [resolvable:$true] %s3001
          %3007 = dma.vmem_to_hbm [thread:$0]  %s3000, 1024, %s3002, %s2987, 128, 128, 8
        $region52: #{attention2_forward.1} parent=35 // pred_fallthru
          _
      $region36: #{attention2_forward.1} parent=5 // pred_fallthru
        _
      %p3008 = scmp.le.s32.totalorder 2, %s17
      // Predicated region
      $region53: #{attention2_forward.1} parent=5 // pred_check
        %p3009 = pneg %p3008
      $region54: #{attention2_forward.1} parent=5 // pred_check_branch
        %3011 = sbr.rel (%p3009) target = $region56
      $region55: #{attention2_forward.1} parent=5 // pred_region
        %s3012 = ssub.s32 %s17, 2
        // Predicated region
        $region57: #{attention2_forward.1} parent=55 // pred_check
          %p3013 = pneg %p135
        $region58: #{attention2_forward.1} parent=55 // pred_check_branch
          %3015 = sbr.rel (%p3013) target = $region60
        $region59: #{attention2_forward.1} parent=55 // pred_region
          %s3016 = sand.u32 %s120, 1
          %s3017 = scalar_lea.sflag [#allocation4], %s3016
          %s3018 = sand.u32 %s120, 1
          %s3019 = smul.addr %s3018, 64
          %s3020 = scalar_lea.vmem [#allocation8], %s3019
          %3022 = dma.done %s3017, 1024
        $region60: #{attention2_forward.1} parent=55 // pred_fallthru
          _
      $region56: #{attention2_forward.1} parent=5 // pred_fallthru
        _
    $region6: #{attention2_forward.1} parent=1 // loop_footer
      %s21 = sadd.s32 1, %s17
    $region7: #{attention2_forward.1} parent=1 // loop_footer_branch
      %16 = sbr.rel target = $region3
    $region8: #{attention2_forward.1} parent=1 // loop_exit
      _
    %3023 = vsyncpa [#allocation3], 1
    %s3024 = scalar_lea.sflag [#allocation3], 1
    %3025 = vsyncpa %s3024, 1
    %3026 = vsyncpa [#allocation6], 1
    %3027 = vsyncpa [#allocation4], 1
    %s3028 = scalar_lea.sflag [#allocation4], 1
    %3029 = vsyncpa %s3028, 1

</llo_original>
